<compile_context>
chip_gen: v7x
topology: tpu7x:2x2x1
jax: 0.10.0
libtpu: 0.0.40
codegen_flags: <defaults>
</compile_context>

<pallas_src>
import functools

import jax
import jax.numpy as jnp
from jax.experimental import pallas as pl
from jax.experimental.pallas import tpu as pltpu


def _round_up(a, b):
    return (a + b - 1) // b * b


def _default_ew_dtype():
    """bf16 elementwise on v6e/v7x (bf16 VPU datapath); f32 on v5e and older."""
    try:
        kind = jax.devices()[0].device_kind.lower()
    except Exception:
        return jnp.float32
    for tag in ("v2", "v3", "v4", "v5"):
        if tag in kind:
            return jnp.float32
    return jnp.bfloat16


# --------------------------------------------------------------------------
# Pallas kernel
# --------------------------------------------------------------------------
def lpfa_kernel(x_ref, nbr_ref, nf_ref, fc_ref,
                wp_ref, wn_ref, b0_ref,
                w1_ref, b1_ref,
                w2_ref, b2_ref,
                out_ref, *, ew_dtype):
    """One tile of tm points.

    x_ref   : (3, tm)       bf16   centre xyz
    nbr_ref : (k, 3, tm)    bf16   neighbour xyz
    nf_ref  : (k, Cin, tm)  bf16   gathered neighbour features
    fc_ref  : (Cin, tm)     f32    centre features
    wp/wn   : (Cin, 3)      bf16   BN-folded xyz2feature weights (centre/nbr)
    w1, w2  : (Cout, Cin), (Cout, Cout) bf16   BN-folded mlp weights
                                   (w2/b2 additionally pre-scaled by 1/k)
    b0/b1/b2: (Cin,1)/(Cout,1)/(Cout,1) f32    BN-folded biases
    out_ref : (Cout, tm)    f32    mean over the k neighbours
    """
    k = nbr_ref.shape[0]
    cout, tm = out_ref.shape
    bf16 = jnp.bfloat16
    use_bf16_ew = ew_dtype == jnp.bfloat16

    def lrelu(v):
        return jnp.maximum(v, 0.2 * v)

    # Small weights: load once per tile.
    wn = wn_ref[...]
    w1 = w1_ref[...]
    w2 = w2_ref[...]

    # Once-per-point term: xyz2feature centre contribution + BN bias minus the
    # centre feature ("feature - x" of the PyTorch code folded in here).
    pxc = (jnp.dot(wp_ref[...], x_ref[...], preferred_element_type=jnp.float32)
           + b0_ref[...] - fc_ref[...])                              # (Cin, tm) f32

    # Hoist bias broadcasts out of the neighbour loop (JAX does not CSE
    # broadcast_in_dim, so these would otherwise be re-materialised per iter).
    b1b = jnp.broadcast_to(b1_ref[...], (cout, tm))                  # f32
    b2b = jnp.broadcast_to(b2_ref[...], (cout, tm))                  # f32

    def body(j, acc):
        # xyz2feature (1x1 conv 9->Cin + BN); pf9 concat eliminated by the
        # weight combine, so only the neighbour-coordinate matmul remains.
        p = jnp.dot(wn, nbr_ref[j], preferred_element_type=jnp.float32)   # (Cin, tm)
        # feature = leaky_relu(feature_nbr - feature_centre + point_feature, 0.2)
        if use_bf16_ew:
            h = lrelu(nf_ref[j] + (p + pxc).astype(bf16))                 # bf16
        else:
            h = lrelu(nf_ref[j].astype(jnp.float32) + p + pxc).astype(bf16)
        # mlp block 1: 1x1 conv Cin->Cout + BN + LeakyReLU
        g1 = jnp.dot(w1, h, preferred_element_type=jnp.float32) + b1b    # (Cout, tm)
        h1 = lrelu(g1.astype(bf16)) if use_bf16_ew else lrelu(g1).astype(bf16)
        # mlp block 2: 1x1 conv Cout->Cout + BN + LeakyReLU; 1/k pre-folded.
        g2 = jnp.dot(w2, h1, preferred_element_type=jnp.float32) + b2b   # (Cout, tm)
        return acc + lrelu(g2)

    out_ref[...] = jax.lax.fori_loop(
        0, k, body, jnp.zeros((cout, tm), jnp.float32), unroll=True)


def _choose_tile(M, tm):
    tm = max(128, min(_round_up(tm, 128), _round_up(M, 128)))
    # Prefer >= 2 grid steps when there is enough work so v7x's two
    # TensorCores both get tiles via the "parallel" grid axis.
    while tm > 512 and (M + tm - 1) // tm < 2:
        tm = max(128, _round_up(tm // 2, 128))
    return tm


def lpfa_pallas(x_lane, nbr_lane, nf_lane, fc_lane, kparams, *,
                tm=4096, ew_dtype=None):
    """x_lane (3,M), nbr_lane (k,3,M), nf_lane (k,Cin,M), fc_lane (Cin,M) -> (Cout,M)."""
    wp, wn, b0, w1t, b1, w2t, b2 = kparams
    _, M = x_lane.shape
    k = nbr_lane.shape[0]
    cin = nf_lane.shape[1]
    cout = w1t.shape[0]
    if ew_dtype is None:
        ew_dtype = _default_ew_dtype()

    tm = _choose_tile(M, tm)
    Mp = _round_up(M, tm)
    if Mp != M:
        pad = Mp - M
        x_lane = jnp.pad(x_lane, ((0, 0), (0, pad)))
        nbr_lane = jnp.pad(nbr_lane, ((0, 0), (0, 0), (0, pad)))
        nf_lane = jnp.pad(nf_lane, ((0, 0), (0, 0), (0, pad)))
        fc_lane = jnp.pad(fc_lane, ((0, 0), (0, pad)))

    full = lambda i: (0, 0)
    # Working set at tm=4096 (k=8, Cin=16, Cout=32) is ~7 MiB incl. double
    # buffering -> comfortably under every generation's scoped VMEM; allow
    # more only if very large tiles are requested.
    vmem_limit = (64 if tm > 8192 else 32) * 1024 * 1024

    out = pl.pallas_call(
        functools.partial(lpfa_kernel, ew_dtype=ew_dtype),
        out_shape=jax.ShapeDtypeStruct((cout, Mp), jnp.float32),
        grid=(Mp // tm,),
        in_specs=[
            pl.BlockSpec((3, tm), lambda i: (0, i)),
            pl.BlockSpec((k, 3, tm), lambda i: (0, 0, i)),
            # Note: on v5e (lowest HBM BW) this largest stream could use
            # pipeline_mode=pl.Buffered(3) if the DMA is ever exposed.
            pl.BlockSpec((k, cin, tm), lambda i: (0, 0, i)),
            pl.BlockSpec((cin, tm), lambda i: (0, i)),
            pl.BlockSpec((cin, 3), full),
            pl.BlockSpec((cin, 3), full),
            pl.BlockSpec((cin, 1), full),
            pl.BlockSpec((cout, cin), full),
            pl.BlockSpec((cout, 1), full),
            pl.BlockSpec((cout, cout), full),
            pl.BlockSpec((cout, 1), full),
        ],
        out_specs=pl.BlockSpec((cout, tm), lambda i: (0, i)),
        compiler_params=pltpu.CompilerParams(
            dimension_semantics=("parallel",),
            vmem_limit_bytes=vmem_limit),
    )(x_lane, nbr_lane, nf_lane, fc_lane, wp, wn, b0, w1t, b1, w2t, b2)
    return out[:, :M]


# --------------------------------------------------------------------------
# Parameter preparation (BN fold, pf9 weight combine, 1/k fold, bf16 cast)
# --------------------------------------------------------------------------
def fold_bn(gamma, beta, mean, var, eps=1e-5):
    scale = gamma / jnp.sqrt(var + eps)
    bias = beta - mean * scale
    return scale[None, :], bias[None, :]


def prepare_params(params, k):
    """Fold BN scales into the conv weights, combine the 3x3-row blocks of the
    xyz2feature weight (eliminating the pf9 concat), fold the 1/k neighbour
    mean into the last conv (LeakyReLU is positively homogeneous, so this is
    exact), and transpose into the kernel's (out, in) bf16 layout."""
    w0, s0, b0, w1, s1, b1, w2, s2, b2 = params
    bf = jnp.bfloat16
    w0s = w0 * s0                                    # (9, Cin), BN scale folded
    wp = (w0s[0:3] - w0s[6:9]).T.astype(bf)          # (Cin, 3): centre-xyz term
    wn = (w0s[3:6] + w0s[6:9]).T.astype(bf)          # (Cin, 3): neighbour term
    w1t = (w1 * s1).T.astype(bf)                     # (Cout, Cin)
    inv_k = 1.0 / float(k)
    w2t = ((w2 * s2) * inv_k).T.astype(bf)           # (Cout, Cout), mean folded
    b2k = b2 * inv_k
    return (wp, wn, b0.reshape(-1, 1).astype(jnp.float32),
            w1t, b1.reshape(-1, 1).astype(jnp.float32),
            w2t, b2k.reshape(-1, 1).astype(jnp.float32))


# --------------------------------------------------------------------------
# Glue: knn / gather (group_feature data movement) and the LPFA wrapper
# --------------------------------------------------------------------------
def knn_idx(xyz, k):
    """xyz: (B, 3, N) -> (B, N, k) indices of the k nearest points (incl. self)."""
    xyz_t = jnp.transpose(xyz, (0, 2, 1))                       # (B, N, 3)
    sq = jnp.sum(xyz_t * xyz_t, axis=-1)                        # (B, N)
    dist = (sq[:, :, None]
            - 2.0 * jnp.einsum('bnd,bmd->bnm', xyz_t, xyz_t)
            + sq[:, None, :])                                   # (B, N, N)
    return jnp.argsort(dist, axis=-1)[:, :, :k]                 # (B, N, k)


def lpfa_forward(x, xyz, params, k, idx=None, *, tm=4096, ew_dtype=None):
    """x: (B, Cin, N), xyz: (B, 3, N) -> (B, Cout, N).  initial=False path."""
    B, cin, N = x.shape
    if idx is None:
        idx = knn_idx(xyz, k)                                   # (B, N, k)

    xyz_t = jnp.transpose(xyz, (0, 2, 1))                       # (B, N, 3)
    x_t = jnp.transpose(x, (0, 2, 1))                           # (B, N, Cin)
    gather = jax.vmap(lambda tbl, ii: tbl[ii])                  # per-batch gather
    nbr = gather(xyz_t, idx)                                    # (B, N, k, 3)
    nbrf = gather(x_t, idx)                                     # (B, N, k, Cin)

    # Lane-dense transposed layouts: point axis last (lanes), channels/k first.
    # The feature-diff (- f_centre) is NOT materialised here; it is folded into
    # the kernel's once-per-point term via fc_lane.
    M = B * N
    bf = jnp.bfloat16
    x_lane = xyz_t.reshape(M, 3).T.astype(bf)                                # (3, M)
    fc_lane = x_t.reshape(M, cin).T.astype(jnp.float32)                      # (Cin, M)
    nbr_lane = jnp.transpose(nbr.reshape(M, k, 3), (1, 2, 0)).astype(bf)     # (k, 3, M)
    nf_lane = jnp.transpose(nbrf.reshape(M, k, cin), (1, 2, 0)).astype(bf)   # (k, Cin, M)

    out = lpfa_pallas(x_lane, nbr_lane, nf_lane, fc_lane,
                      prepare_params(params, k), tm=tm, ew_dtype=ew_dtype)
    cout = out.shape[0]
    return jnp.transpose(out.reshape(cout, B, N), (1, 0, 2))    # (B, Cout, N)


def lpfa_reference(x, xyz, params, k, idx=None, *, ew_dtype=None):
    """Pure-jnp reference of the same folded math (eval-mode BN, bf16 weights
    and matmul activations, matching elementwise dtype, f32 accumulation)."""
    B, cin, N = x.shape
    if idx is None:
        idx = knn_idx(xyz, k)
    if ew_dtype is None:
        ew_dtype = _default_ew_dtype()
    wp, wn, b0, w1t, b1, w2t, b2 = prepare_params(params, k)
    bf, f32 = jnp.bfloat16, jnp.float32
    use_bf16 = ew_dtype == bf
    lrelu = lambda v: jnp.maximum(v, 0.2 * v)

    xyz_t = jnp.transpose(xyz, (0, 2, 1))                       # (B, N, 3)
    x_t = jnp.transpose(x, (0, 2, 1))                           # (B, N, Cin)
    gather = jax.vmap(lambda tbl, ii: tbl[ii])
    nbr = gather(xyz_t, idx).astype(bf)                         # (B, N, k, 3)
    nbrf = gather(x_t, idx).astype(bf)                          # (B, N, k, Cin)

    px = (jnp.einsum('bnd,cd->bnc', xyz_t.astype(bf), wp,
                     preferred_element_type=f32) + b0[:, 0] - x_t)   # (B, N, Cin)
    pn = jnp.einsum('bnkd,cd->bnkc', nbr, wn,
                    preferred_element_type=f32)                      # (B, N, k, Cin)
    t = pn + px[:, :, None, :]
    if use_bf16:
        h = lrelu(nbrf + t.astype(bf))
    else:
        h = lrelu(nbrf.astype(f32) + t).astype(bf)
    g1 = jnp.einsum('bnkc,dc->bnkd', h, w1t, preferred_element_type=f32) + b1[:, 0]
    h1 = lrelu(g1.astype(bf)) if use_bf16 else lrelu(g1).astype(bf)
    g2 = jnp.einsum('bnkc,dc->bnkd', h1, w2t, preferred_element_type=f32) + b2[:, 0]
    out = jnp.sum(lrelu(g2), axis=2)                             # 1/k folded in w2t/b2
    return jnp.transpose(out, (0, 2, 1))                         # (B, Cout, N)


def lpfa_reference_unfolded(x, xyz, params, k, idx=None):
    """Full-f32, unfolded reference mirroring the PyTorch module structure
    (pf9 concat -> conv 9->Cin -> BN -> +feature_diff -> lrelu -> mlp -> mean).
    Validates the pf9 / BN / 1-over-k folding independently."""
    w0, s0, b0, w1, s1, b1, w2, s2, b2 = params
    B, cin, N = x.shape
    if idx is None:
        idx = knn_idx(xyz, k)
    lrelu = lambda v: jnp.maximum(v, 0.2 * v)

    xyz_t = jnp.transpose(xyz, (0, 2, 1))                       # (B, N, 3)
    x_t = jnp.transpose(x, (0, 2, 1))                           # (B, N, Cin)
    gather = jax.vmap(lambda tbl, ii: tbl[ii])
    nbr = gather(xyz_t, idx)                                    # (B, N, k, 3)
    pts = jnp.broadcast_to(xyz_t[:, :, None, :], nbr.shape)
    pf9 = jnp.concatenate([pts, nbr, nbr - pts], axis=-1)       # (B, N, k, 9)
    pfeat = jnp.einsum('bnkd,dc->bnkc', pf9, w0) * s0 + b0      # conv + BN (eval)
    fd = gather(x_t, idx) - x_t[:, :, None, :]                  # (B, N, k, Cin)
    h = lrelu(fd + pfeat)
    h = lrelu(jnp.einsum('bnkc,cd->bnkd', h, w1) * s1 + b1)
    h = lrelu(jnp.einsum('bnkc,cd->bnkd', h, w2) * s2 + b2)
    return jnp.transpose(jnp.mean(h, axis=2), (0, 2, 1))        # (B, Cout, N)


def make_params(key, in_channel, out_channel):
    """Deterministic synthetic weights (Conv2d 1x1 no-bias + BN eval stats)."""
    ks = jax.random.split(key, 9)
    # Conv weights stored already transposed for x @ W form: (Cin_prev, Cout).
    w0 = 0.2 * jax.random.normal(ks[0], (9, in_channel), jnp.float32)
    w1 = 0.2 * jax.random.normal(ks[1], (in_channel, out_channel), jnp.float32)
    w2 = 0.2 * jax.random.normal(ks[2], (out_channel, out_channel), jnp.float32)

    def bn(kg, kb, km, kv, c):
        gamma = 1.0 + 0.1 * jax.random.normal(kg, (c,), jnp.float32)
        beta = 0.1 * jax.random.normal(kb, (c,), jnp.float32)
        mean = 0.05 * jax.random.normal(km, (c,), jnp.float32)
        var = 1.0 + 0.1 * jax.random.uniform(kv, (c,), jnp.float32)
        return fold_bn(gamma, beta, mean, var)

    s0, b0 = bn(ks[3], ks[4], ks[5], ks[6], in_channel)
    k2 = jax.random.split(ks[7], 4)
    s1, b1 = bn(k2[0], k2[1], k2[2], k2[3], out_channel)
    k3 = jax.random.split(ks[8], 4)
    s2, b2 = bn(k3[0], k3[1], k3[2], k3[3], out_channel)
    return (w0, s0, b0, w1, s1, b1, w2, s2, b2)


if __name__ == "__main__":
    # Small shapes consistent with the module: B=2 point clouds, N=64 points,
    # k=8 neighbours, in_channel=16, out_channel=32.
    B, N, K = 2, 64, 8
    IN_CH, OUT_CH = 16, 32

    key = jax.random.PRNGKey(0)
    kx, kxyz, kp = jax.random.split(key, 3)
    x = jax.random.normal(kx, (B, IN_CH, N), jnp.float32)
    xyz = jax.random.normal(kxyz, (B, 3, N), jnp.float32)
    params = make_params(kp, IN_CH, OUT_CH)
    idx = knn_idx(xyz, K)

    out = jax.block_until_ready(lpfa_forward(x, xyz, params, K, idx=idx))
    ref = jax.block_until_ready(lpfa_reference(x, xyz, params, K, idx=idx))
    ref_pt = jax.block_until_ready(lpfa_reference_unfolded(x, xyz, params, K, idx=idx))

    assert out.shape == (B, OUT_CH, N), out.shape
    # Tight check against the matched (folded, same precision path) reference.
    err = float(jnp.max(jnp.abs(out - ref)))
    assert jnp.allclose(out, ref, atol=5e-3, rtol=5e-3), err
    # Looser check against the unfolded f32 PyTorch-structured reference
    # (validates pf9 / BN / 1-over-k folding; slack covers bf16 rounding).
    err_pt = float(jnp.max(jnp.abs(out - ref_pt)))
    assert jnp.allclose(out, ref_pt, atol=1.5e-1, rtol=1e-1), err_pt
    print("KERNEL_OK")
</pallas_src>

<mosaic_0001>
module attributes {stable_mosaic.version = 11 : i64} {
  func.func @lpfa_kernel(%arg0: i32, %arg1: memref<3x128xbf16, #tpu.memory_space<vmem>>, %arg2: memref<8x3x128xbf16, #tpu.memory_space<vmem>>, %arg3: memref<8x16x128xbf16, #tpu.memory_space<vmem>>, %arg4: memref<16x128xf32, #tpu.memory_space<vmem>>, %arg5: memref<16x3xbf16, #tpu.memory_space<vmem>>, %arg6: memref<16x3xbf16, #tpu.memory_space<vmem>>, %arg7: memref<16x1xf32, #tpu.memory_space<vmem>>, %arg8: memref<32x16xbf16, #tpu.memory_space<vmem>>, %arg9: memref<32x1xf32, #tpu.memory_space<vmem>>, %arg10: memref<32x32xbf16, #tpu.memory_space<vmem>>, %arg11: memref<32x1xf32, #tpu.memory_space<vmem>>, %arg12: memref<32x128xf32, #tpu.memory_space<vmem>>) attributes {dimension_semantics = [#tpu.dimension_semantics<parallel>], iteration_bounds = array<i64: 1>, scalar_prefetch = 0 : i64, scratch_operands = 0 : i64, tpu.core_type = #tpu.core_type<tc>, window_params = [{transform_indices = @transform_0, window_bounds = array<i64: 3, 128>}, {transform_indices = @transform_1, window_bounds = array<i64: 8, 3, 128>}, {transform_indices = @transform_2, window_bounds = array<i64: 8, 16, 128>}, {transform_indices = @transform_3, window_bounds = array<i64: 16, 128>}, {pipeline_mode = #tpu.pipeline_mode<synchronous>, transform_indices = @transform_4, window_bounds = array<i64: 16, 3>}, {pipeline_mode = #tpu.pipeline_mode<synchronous>, transform_indices = @transform_5, window_bounds = array<i64: 16, 3>}, {pipeline_mode = #tpu.pipeline_mode<synchronous>, transform_indices = @transform_6, window_bounds = array<i64: 16, 1>}, {pipeline_mode = #tpu.pipeline_mode<synchronous>, transform_indices = @transform_7, window_bounds = array<i64: 32, 16>}, {pipeline_mode = #tpu.pipeline_mode<synchronous>, transform_indices = @transform_8, window_bounds = array<i64: 32, 1>}, {pipeline_mode = #tpu.pipeline_mode<synchronous>, transform_indices = @transform_9, window_bounds = array<i64: 32, 32>}, {pipeline_mode = #tpu.pipeline_mode<synchronous>, transform_indices = @transform_10, window_bounds = array<i64: 32, 1>}, {transform_indices = @transform_11, window_bounds = array<i64: 32, 128>}]} {
    %c0 = arith.constant 0 : index
    %c0_0 = arith.constant 0 : index
    %0 = vector.load %arg6[%c0, %c0_0] : memref<16x3xbf16, #tpu.memory_space<vmem>>, vector<16x3xbf16>
    %c0_1 = arith.constant 0 : index
    %c0_2 = arith.constant 0 : index
    %1 = vector.load %arg8[%c0_1, %c0_2] : memref<32x16xbf16, #tpu.memory_space<vmem>>, vector<32x16xbf16>
    %c0_3 = arith.constant 0 : index
    %c0_4 = arith.constant 0 : index
    %2 = vector.load %arg10[%c0_3, %c0_4] : memref<32x32xbf16, #tpu.memory_space<vmem>>, vector<32x32xbf16>
    %c0_5 = arith.constant 0 : index
    %c0_6 = arith.constant 0 : index
    %3 = vector.load %arg5[%c0_5, %c0_6] : memref<16x3xbf16, #tpu.memory_space<vmem>>, vector<16x3xbf16>
    %c0_7 = arith.constant 0 : index
    %c0_8 = arith.constant 0 : index
    %4 = vector.load %arg1[%c0_7, %c0_8] : memref<3x128xbf16, #tpu.memory_space<vmem>>, vector<3x128xbf16>
    %cst = arith.constant dense<0.000000e+00> : vector<16x128xf32>
    %5 = tpu.matmul %3, %4, %cst {dimension_numbers = #tpu.dot_dimension_numbers<[1], [0], [0], [1], [0, 0, 1, 1], [], []>} : vector<16x3xbf16>, vector<3x128xbf16>, vector<16x128xf32> -> vector<16x128xf32>
    %c0_9 = arith.constant 0 : index
    %c0_10 = arith.constant 0 : index
    %6 = vector.load %arg7[%c0_9, %c0_10] : memref<16x1xf32, #tpu.memory_space<vmem>>, vector<16x1xf32>
    %7 = vector.broadcast %6 : vector<16x1xf32> to vector<16x128xf32>
    %8 = arith.addf %5, %7 : vector<16x128xf32>
    %c0_11 = arith.constant 0 : index
    %c0_12 = arith.constant 0 : index
    %9 = vector.load %arg4[%c0_11, %c0_12] : memref<16x128xf32, #tpu.memory_space<vmem>>, vector<16x128xf32>
    %10 = arith.subf %8, %9 : vector<16x128xf32>
    %c0_13 = arith.constant 0 : index
    %c0_14 = arith.constant 0 : index
    %11 = vector.load %arg9[%c0_13, %c0_14] : memref<32x1xf32, #tpu.memory_space<vmem>>, vector<32x1xf32>
    %12 = vector.shape_cast %11 : vector<32x1xf32> to vector<32x1xf32>
    %13 = vector.broadcast %12 : vector<32x1xf32> to vector<32x128xf32>
    %c0_15 = arith.constant 0 : index
    %c0_16 = arith.constant 0 : index
    %14 = vector.load %arg11[%c0_15, %c0_16] : memref<32x1xf32, #tpu.memory_space<vmem>>, vector<32x1xf32>
    %15 = vector.shape_cast %14 : vector<32x1xf32> to vector<32x1xf32>
    %16 = vector.broadcast %15 : vector<32x1xf32> to vector<32x128xf32>
    %cst_17 = arith.constant 0.000000e+00 : f32
    %17 = vector.broadcast %cst_17 : f32 to vector<32x128xf32>
    %c0_i32 = arith.constant 0 : i32
    %18 = arith.index_cast %c0_i32 : i32 to index
    %c0_18 = arith.constant 0 : index
    %c0_19 = arith.constant 0 : index
    %19 = vector.load %arg2[%18, %c0_18, %c0_19] : memref<8x3x128xbf16, #tpu.memory_space<vmem>>, vector<1x3x128xbf16>
    %20 = vector.shape_cast %19 : vector<1x3x128xbf16> to vector<3x128xbf16>
    %cst_20 = arith.constant dense<0.000000e+00> : vector<16x128xf32>
    %21 = tpu.matmul %0, %20, %cst_20 {dimension_numbers = #tpu.dot_dimension_numbers<[1], [0], [0], [1], [0, 0, 1, 1], [], []>} : vector<16x3xbf16>, vector<3x128xbf16>, vector<16x128xf32> -> vector<16x128xf32>
    %22 = arith.index_cast %c0_i32 : i32 to index
    %c0_21 = arith.constant 0 : index
    %c0_22 = arith.constant 0 : index
    %23 = vector.load %arg3[%22, %c0_21, %c0_22] : memref<8x16x128xbf16, #tpu.memory_space<vmem>>, vector<1x16x128xbf16>
    %24 = vector.shape_cast %23 : vector<1x16x128xbf16> to vector<16x128xbf16>
    %25 = arith.addf %21, %10 : vector<16x128xf32>
    %26 = arith.truncf %25 : vector<16x128xf32> to vector<16x128xbf16>
    %27 = arith.addf %24, %26 : vector<16x128xbf16>
    %cst_23 = arith.constant 2.001950e-01 : bf16
    %28 = vector.broadcast %cst_23 : bf16 to vector<16x128xbf16>
    %29 = arith.mulf %28, %27 : vector<16x128xbf16>
    %30 = arith.maximumf %27, %29 : vector<16x128xbf16>
    %cst_24 = arith.constant dense<0.000000e+00> : vector<32x128xf32>
    %31 = tpu.matmul %1, %30, %cst_24 {dimension_numbers = #tpu.dot_dimension_numbers<[1], [0], [0], [1], [0, 0, 1, 1], [], []>} : vector<32x16xbf16>, vector<16x128xbf16>, vector<32x128xf32> -> vector<32x128xf32>
    %32 = arith.addf %31, %13 : vector<32x128xf32>
    %33 = arith.truncf %32 : vector<32x128xf32> to vector<32x128xbf16>
    %cst_25 = arith.constant 2.001950e-01 : bf16
    %34 = vector.broadcast %cst_25 : bf16 to vector<32x128xbf16>
    %35 = arith.mulf %34, %33 : vector<32x128xbf16>
    %36 = arith.maximumf %33, %35 : vector<32x128xbf16>
    %cst_26 = arith.constant dense<0.000000e+00> : vector<32x128xf32>
    %37 = tpu.matmul %2, %36, %cst_26 {dimension_numbers = #tpu.dot_dimension_numbers<[1], [0], [0], [1], [0, 0, 1, 1], [], []>} : vector<32x32xbf16>, vector<32x128xbf16>, vector<32x128xf32> -> vector<32x128xf32>
    %38 = arith.addf %37, %16 : vector<32x128xf32>
    %cst_27 = arith.constant 2.000000e-01 : f32
    %39 = vector.broadcast %cst_27 : f32 to vector<32x128xf32>
    %40 = arith.mulf %39, %38 : vector<32x128xf32>
    %41 = arith.maximumf %38, %40 : vector<32x128xf32>
    %42 = arith.addf %17, %41 : vector<32x128xf32>
    %c1_i32 = arith.constant 1 : i32
    %43 = arith.index_cast %c1_i32 : i32 to index
    %c0_28 = arith.constant 0 : index
    %c0_29 = arith.constant 0 : index
    %44 = vector.load %arg2[%43, %c0_28, %c0_29] : memref<8x3x128xbf16, #tpu.memory_space<vmem>>, vector<1x3x128xbf16>
    %45 = vector.shape_cast %44 : vector<1x3x128xbf16> to vector<3x128xbf16>
    %cst_30 = arith.constant dense<0.000000e+00> : vector<16x128xf32>
    %46 = tpu.matmul %0, %45, %cst_30 {dimension_numbers = #tpu.dot_dimension_numbers<[1], [0], [0], [1], [0, 0, 1, 1], [], []>} : vector<16x3xbf16>, vector<3x128xbf16>, vector<16x128xf32> -> vector<16x128xf32>
    %47 = arith.index_cast %c1_i32 : i32 to index
    %c0_31 = arith.constant 0 : index
    %c0_32 = arith.constant 0 : index
    %48 = vector.load %arg3[%47, %c0_31, %c0_32] : memref<8x16x128xbf16, #tpu.memory_space<vmem>>, vector<1x16x128xbf16>
    %49 = vector.shape_cast %48 : vector<1x16x128xbf16> to vector<16x128xbf16>
    %50 = arith.addf %46, %10 : vector<16x128xf32>
    %51 = arith.truncf %50 : vector<16x128xf32> to vector<16x128xbf16>
    %52 = arith.addf %49, %51 : vector<16x128xbf16>
    %cst_33 = arith.constant 2.001950e-01 : bf16
    %53 = vector.broadcast %cst_33 : bf16 to vector<16x128xbf16>
    %54 = arith.mulf %53, %52 : vector<16x128xbf16>
    %55 = arith.maximumf %52, %54 : vector<16x128xbf16>
    %cst_34 = arith.constant dense<0.000000e+00> : vector<32x128xf32>
    %56 = tpu.matmul %1, %55, %cst_34 {dimension_numbers = #tpu.dot_dimension_numbers<[1], [0], [0], [1], [0, 0, 1, 1], [], []>} : vector<32x16xbf16>, vector<16x128xbf16>, vector<32x128xf32> -> vector<32x128xf32>
    %57 = arith.addf %56, %13 : vector<32x128xf32>
    %58 = arith.truncf %57 : vector<32x128xf32> to vector<32x128xbf16>
    %cst_35 = arith.constant 2.001950e-01 : bf16
    %59 = vector.broadcast %cst_35 : bf16 to vector<32x128xbf16>
    %60 = arith.mulf %59, %58 : vector<32x128xbf16>
    %61 = arith.maximumf %58, %60 : vector<32x128xbf16>
    %cst_36 = arith.constant dense<0.000000e+00> : vector<32x128xf32>
    %62 = tpu.matmul %2, %61, %cst_36 {dimension_numbers = #tpu.dot_dimension_numbers<[1], [0], [0], [1], [0, 0, 1, 1], [], []>} : vector<32x32xbf16>, vector<32x128xbf16>, vector<32x128xf32> -> vector<32x128xf32>
    %63 = arith.addf %62, %16 : vector<32x128xf32>
    %cst_37 = arith.constant 2.000000e-01 : f32
    %64 = vector.broadcast %cst_37 : f32 to vector<32x128xf32>
    %65 = arith.mulf %64, %63 : vector<32x128xf32>
    %66 = arith.maximumf %63, %65 : vector<32x128xf32>
    %67 = arith.addf %42, %66 : vector<32x128xf32>
    %c2_i32 = arith.constant 2 : i32
    %68 = arith.index_cast %c2_i32 : i32 to index
    %c0_38 = arith.constant 0 : index
    %c0_39 = arith.constant 0 : index
    %69 = vector.load %arg2[%68, %c0_38, %c0_39] : memref<8x3x128xbf16, #tpu.memory_space<vmem>>, vector<1x3x128xbf16>
    %70 = vector.shape_cast %69 : vector<1x3x128xbf16> to vector<3x128xbf16>
    %cst_40 = arith.constant dense<0.000000e+00> : vector<16x128xf32>
    %71 = tpu.matmul %0, %70, %cst_40 {dimension_numbers = #tpu.dot_dimension_numbers<[1], [0], [0], [1], [0, 0, 1, 1], [], []>} : vector<16x3xbf16>, vector<3x128xbf16>, vector<16x128xf32> -> vector<16x128xf32>
    %72 = arith.index_cast %c2_i32 : i32 to index
    %c0_41 = arith.constant 0 : index
    %c0_42 = arith.constant 0 : index
    %73 = vector.load %arg3[%72, %c0_41, %c0_42] : memref<8x16x128xbf16, #tpu.memory_space<vmem>>, vector<1x16x128xbf16>
    %74 = vector.shape_cast %73 : vector<1x16x128xbf16> to vector<16x128xbf16>
    %75 = arith.addf %71, %10 : vector<16x128xf32>
    %76 = arith.truncf %75 : vector<16x128xf32> to vector<16x128xbf16>
    %77 = arith.addf %74, %76 : vector<16x128xbf16>
    %cst_43 = arith.constant 2.001950e-01 : bf16
    %78 = vector.broadcast %cst_43 : bf16 to vector<16x128xbf16>
    %79 = arith.mulf %78, %77 : vector<16x128xbf16>
    %80 = arith.maximumf %77, %79 : vector<16x128xbf16>
    %cst_44 = arith.constant dense<0.000000e+00> : vector<32x128xf32>
    %81 = tpu.matmul %1, %80, %cst_44 {dimension_numbers = #tpu.dot_dimension_numbers<[1], [0], [0], [1], [0, 0, 1, 1], [], []>} : vector<32x16xbf16>, vector<16x128xbf16>, vector<32x128xf32> -> vector<32x128xf32>
    %82 = arith.addf %81, %13 : vector<32x128xf32>
    %83 = arith.truncf %82 : vector<32x128xf32> to vector<32x128xbf16>
    %cst_45 = arith.constant 2.001950e-01 : bf16
    %84 = vector.broadcast %cst_45 : bf16 to vector<32x128xbf16>
    %85 = arith.mulf %84, %83 : vector<32x128xbf16>
    %86 = arith.maximumf %83, %85 : vector<32x128xbf16>
    %cst_46 = arith.constant dense<0.000000e+00> : vector<32x128xf32>
    %87 = tpu.matmul %2, %86, %cst_46 {dimension_numbers = #tpu.dot_dimension_numbers<[1], [0], [0], [1], [0, 0, 1, 1], [], []>} : vector<32x32xbf16>, vector<32x128xbf16>, vector<32x128xf32> -> vector<32x128xf32>
    %88 = arith.addf %87, %16 : vector<32x128xf32>
    %cst_47 = arith.constant 2.000000e-01 : f32
    %89 = vector.broadcast %cst_47 : f32 to vector<32x128xf32>
    %90 = arith.mulf %89, %88 : vector<32x128xf32>
    %91 = arith.maximumf %88, %90 : vector<32x128xf32>
    %92 = arith.addf %67, %91 : vector<32x128xf32>
    %c3_i32 = arith.constant 3 : i32
    %93 = arith.index_cast %c3_i32 : i32 to index
    %c0_48 = arith.constant 0 : index
    %c0_49 = arith.constant 0 : index
    %94 = vector.load %arg2[%93, %c0_48, %c0_49] : memref<8x3x128xbf16, #tpu.memory_space<vmem>>, vector<1x3x128xbf16>
    %95 = vector.shape_cast %94 : vector<1x3x128xbf16> to vector<3x128xbf16>
    %cst_50 = arith.constant dense<0.000000e+00> : vector<16x128xf32>
    %96 = tpu.matmul %0, %95, %cst_50 {dimension_numbers = #tpu.dot_dimension_numbers<[1], [0], [0], [1], [0, 0, 1, 1], [], []>} : vector<16x3xbf16>, vector<3x128xbf16>, vector<16x128xf32> -> vector<16x128xf32>
    %97 = arith.index_cast %c3_i32 : i32 to index
    %c0_51 = arith.constant 0 : index
    %c0_52 = arith.constant 0 : index
    %98 = vector.load %arg3[%97, %c0_51, %c0_52] : memref<8x16x128xbf16, #tpu.memory_space<vmem>>, vector<1x16x128xbf16>
    %99 = vector.shape_cast %98 : vector<1x16x128xbf16> to vector<16x128xbf16>
    %100 = arith.addf %96, %10 : vector<16x128xf32>
    %101 = arith.truncf %100 : vector<16x128xf32> to vector<16x128xbf16>
    %102 = arith.addf %99, %101 : vector<16x128xbf16>
    %cst_53 = arith.constant 2.001950e-01 : bf16
    %103 = vector.broadcast %cst_53 : bf16 to vector<16x128xbf16>
    %104 = arith.mulf %103, %102 : vector<16x128xbf16>
    %105 = arith.maximumf %102, %104 : vector<16x128xbf16>
    %cst_54 = arith.constant dense<0.000000e+00> : vector<32x128xf32>
    %106 = tpu.matmul %1, %105, %cst_54 {dimension_numbers = #tpu.dot_dimension_numbers<[1], [0], [0], [1], [0, 0, 1, 1], [], []>} : vector<32x16xbf16>, vector<16x128xbf16>, vector<32x128xf32> -> vector<32x128xf32>
    %107 = arith.addf %106, %13 : vector<32x128xf32>
    %108 = arith.truncf %107 : vector<32x128xf32> to vector<32x128xbf16>
    %cst_55 = arith.constant 2.001950e-01 : bf16
    %109 = vector.broadcast %cst_55 : bf16 to vector<32x128xbf16>
    %110 = arith.mulf %109, %108 : vector<32x128xbf16>
    %111 = arith.maximumf %108, %110 : vector<32x128xbf16>
    %cst_56 = arith.constant dense<0.000000e+00> : vector<32x128xf32>
    %112 = tpu.matmul %2, %111, %cst_56 {dimension_numbers = #tpu.dot_dimension_numbers<[1], [0], [0], [1], [0, 0, 1, 1], [], []>} : vector<32x32xbf16>, vector<32x128xbf16>, vector<32x128xf32> -> vector<32x128xf32>
    %113 = arith.addf %112, %16 : vector<32x128xf32>
    %cst_57 = arith.constant 2.000000e-01 : f32
    %114 = vector.broadcast %cst_57 : f32 to vector<32x128xf32>
    %115 = arith.mulf %114, %113 : vector<32x128xf32>
    %116 = arith.maximumf %113, %115 : vector<32x128xf32>
    %117 = arith.addf %92, %116 : vector<32x128xf32>
    %c4_i32 = arith.constant 4 : i32
    %118 = arith.index_cast %c4_i32 : i32 to index
    %c0_58 = arith.constant 0 : index
    %c0_59 = arith.constant 0 : index
    %119 = vector.load %arg2[%118, %c0_58, %c0_59] : memref<8x3x128xbf16, #tpu.memory_space<vmem>>, vector<1x3x128xbf16>
    %120 = vector.shape_cast %119 : vector<1x3x128xbf16> to vector<3x128xbf16>
    %cst_60 = arith.constant dense<0.000000e+00> : vector<16x128xf32>
    %121 = tpu.matmul %0, %120, %cst_60 {dimension_numbers = #tpu.dot_dimension_numbers<[1], [0], [0], [1], [0, 0, 1, 1], [], []>} : vector<16x3xbf16>, vector<3x128xbf16>, vector<16x128xf32> -> vector<16x128xf32>
    %122 = arith.index_cast %c4_i32 : i32 to index
    %c0_61 = arith.constant 0 : index
    %c0_62 = arith.constant 0 : index
    %123 = vector.load %arg3[%122, %c0_61, %c0_62] : memref<8x16x128xbf16, #tpu.memory_space<vmem>>, vector<1x16x128xbf16>
    %124 = vector.shape_cast %123 : vector<1x16x128xbf16> to vector<16x128xbf16>
    %125 = arith.addf %121, %10 : vector<16x128xf32>
    %126 = arith.truncf %125 : vector<16x128xf32> to vector<16x128xbf16>
    %127 = arith.addf %124, %126 : vector<16x128xbf16>
    %cst_63 = arith.constant 2.001950e-01 : bf16
    %128 = vector.broadcast %cst_63 : bf16 to vector<16x128xbf16>
    %129 = arith.mulf %128, %127 : vector<16x128xbf16>
    %130 = arith.maximumf %127, %129 : vector<16x128xbf16>
    %cst_64 = arith.constant dense<0.000000e+00> : vector<32x128xf32>
    %131 = tpu.matmul %1, %130, %cst_64 {dimension_numbers = #tpu.dot_dimension_numbers<[1], [0], [0], [1], [0, 0, 1, 1], [], []>} : vector<32x16xbf16>, vector<16x128xbf16>, vector<32x128xf32> -> vector<32x128xf32>
    %132 = arith.addf %131, %13 : vector<32x128xf32>
    %133 = arith.truncf %132 : vector<32x128xf32> to vector<32x128xbf16>
    %cst_65 = arith.constant 2.001950e-01 : bf16
    %134 = vector.broadcast %cst_65 : bf16 to vector<32x128xbf16>
    %135 = arith.mulf %134, %133 : vector<32x128xbf16>
    %136 = arith.maximumf %133, %135 : vector<32x128xbf16>
    %cst_66 = arith.constant dense<0.000000e+00> : vector<32x128xf32>
    %137 = tpu.matmul %2, %136, %cst_66 {dimension_numbers = #tpu.dot_dimension_numbers<[1], [0], [0], [1], [0, 0, 1, 1], [], []>} : vector<32x32xbf16>, vector<32x128xbf16>, vector<32x128xf32> -> vector<32x128xf32>
    %138 = arith.addf %137, %16 : vector<32x128xf32>
    %cst_67 = arith.constant 2.000000e-01 : f32
    %139 = vector.broadcast %cst_67 : f32 to vector<32x128xf32>
    %140 = arith.mulf %139, %138 : vector<32x128xf32>
    %141 = arith.maximumf %138, %140 : vector<32x128xf32>
    %142 = arith.addf %117, %141 : vector<32x128xf32>
    %c5_i32 = arith.constant 5 : i32
    %143 = arith.index_cast %c5_i32 : i32 to index
    %c0_68 = arith.constant 0 : index
    %c0_69 = arith.constant 0 : index
    %144 = vector.load %arg2[%143, %c0_68, %c0_69] : memref<8x3x128xbf16, #tpu.memory_space<vmem>>, vector<1x3x128xbf16>
    %145 = vector.shape_cast %144 : vector<1x3x128xbf16> to vector<3x128xbf16>
    %cst_70 = arith.constant dense<0.000000e+00> : vector<16x128xf32>
    %146 = tpu.matmul %0, %145, %cst_70 {dimension_numbers = #tpu.dot_dimension_numbers<[1], [0], [0], [1], [0, 0, 1, 1], [], []>} : vector<16x3xbf16>, vector<3x128xbf16>, vector<16x128xf32> -> vector<16x128xf32>
    %147 = arith.index_cast %c5_i32 : i32 to index
    %c0_71 = arith.constant 0 : index
    %c0_72 = arith.constant 0 : index
    %148 = vector.load %arg3[%147, %c0_71, %c0_72] : memref<8x16x128xbf16, #tpu.memory_space<vmem>>, vector<1x16x128xbf16>
    %149 = vector.shape_cast %148 : vector<1x16x128xbf16> to vector<16x128xbf16>
    %150 = arith.addf %146, %10 : vector<16x128xf32>
    %151 = arith.truncf %150 : vector<16x128xf32> to vector<16x128xbf16>
    %152 = arith.addf %149, %151 : vector<16x128xbf16>
    %cst_73 = arith.constant 2.001950e-01 : bf16
    %153 = vector.broadcast %cst_73 : bf16 to vector<16x128xbf16>
    %154 = arith.mulf %153, %152 : vector<16x128xbf16>
    %155 = arith.maximumf %152, %154 : vector<16x128xbf16>
    %cst_74 = arith.constant dense<0.000000e+00> : vector<32x128xf32>
    %156 = tpu.matmul %1, %155, %cst_74 {dimension_numbers = #tpu.dot_dimension_numbers<[1], [0], [0], [1], [0, 0, 1, 1], [], []>} : vector<32x16xbf16>, vector<16x128xbf16>, vector<32x128xf32> -> vector<32x128xf32>
    %157 = arith.addf %156, %13 : vector<32x128xf32>
    %158 = arith.truncf %157 : vector<32x128xf32> to vector<32x128xbf16>
    %cst_75 = arith.constant 2.001950e-01 : bf16
    %159 = vector.broadcast %cst_75 : bf16 to vector<32x128xbf16>
    %160 = arith.mulf %159, %158 : vector<32x128xbf16>
    %161 = arith.maximumf %158, %160 : vector<32x128xbf16>
    %cst_76 = arith.constant dense<0.000000e+00> : vector<32x128xf32>
    %162 = tpu.matmul %2, %161, %cst_76 {dimension_numbers = #tpu.dot_dimension_numbers<[1], [0], [0], [1], [0, 0, 1, 1], [], []>} : vector<32x32xbf16>, vector<32x128xbf16>, vector<32x128xf32> -> vector<32x128xf32>
    %163 = arith.addf %162, %16 : vector<32x128xf32>
    %cst_77 = arith.constant 2.000000e-01 : f32
    %164 = vector.broadcast %cst_77 : f32 to vector<32x128xf32>
    %165 = arith.mulf %164, %163 : vector<32x128xf32>
    %166 = arith.maximumf %163, %165 : vector<32x128xf32>
    %167 = arith.addf %142, %166 : vector<32x128xf32>
    %c6_i32 = arith.constant 6 : i32
    %168 = arith.index_cast %c6_i32 : i32 to index
    %c0_78 = arith.constant 0 : index
    %c0_79 = arith.constant 0 : index
    %169 = vector.load %arg2[%168, %c0_78, %c0_79] : memref<8x3x128xbf16, #tpu.memory_space<vmem>>, vector<1x3x128xbf16>
    %170 = vector.shape_cast %169 : vector<1x3x128xbf16> to vector<3x128xbf16>
    %cst_80 = arith.constant dense<0.000000e+00> : vector<16x128xf32>
    %171 = tpu.matmul %0, %170, %cst_80 {dimension_numbers = #tpu.dot_dimension_numbers<[1], [0], [0], [1], [0, 0, 1, 1], [], []>} : vector<16x3xbf16>, vector<3x128xbf16>, vector<16x128xf32> -> vector<16x128xf32>
    %172 = arith.index_cast %c6_i32 : i32 to index
    %c0_81 = arith.constant 0 : index
    %c0_82 = arith.constant 0 : index
    %173 = vector.load %arg3[%172, %c0_81, %c0_82] : memref<8x16x128xbf16, #tpu.memory_space<vmem>>, vector<1x16x128xbf16>
    %174 = vector.shape_cast %173 : vector<1x16x128xbf16> to vector<16x128xbf16>
    %175 = arith.addf %171, %10 : vector<16x128xf32>
    %176 = arith.truncf %175 : vector<16x128xf32> to vector<16x128xbf16>
    %177 = arith.addf %174, %176 : vector<16x128xbf16>
    %cst_83 = arith.constant 2.001950e-01 : bf16
    %178 = vector.broadcast %cst_83 : bf16 to vector<16x128xbf16>
    %179 = arith.mulf %178, %177 : vector<16x128xbf16>
    %180 = arith.maximumf %177, %179 : vector<16x128xbf16>
    %cst_84 = arith.constant dense<0.000000e+00> : vector<32x128xf32>
    %181 = tpu.matmul %1, %180, %cst_84 {dimension_numbers = #tpu.dot_dimension_numbers<[1], [0], [0], [1], [0, 0, 1, 1], [], []>} : vector<32x16xbf16>, vector<16x128xbf16>, vector<32x128xf32> -> vector<32x128xf32>
    %182 = arith.addf %181, %13 : vector<32x128xf32>
    %183 = arith.truncf %182 : vector<32x128xf32> to vector<32x128xbf16>
    %cst_85 = arith.constant 2.001950e-01 : bf16
    %184 = vector.broadcast %cst_85 : bf16 to vector<32x128xbf16>
    %185 = arith.mulf %184, %183 : vector<32x128xbf16>
    %186 = arith.maximumf %183, %185 : vector<32x128xbf16>
    %cst_86 = arith.constant dense<0.000000e+00> : vector<32x128xf32>
    %187 = tpu.matmul %2, %186, %cst_86 {dimension_numbers = #tpu.dot_dimension_numbers<[1], [0], [0], [1], [0, 0, 1, 1], [], []>} : vector<32x32xbf16>, vector<32x128xbf16>, vector<32x128xf32> -> vector<32x128xf32>
    %188 = arith.addf %187, %16 : vector<32x128xf32>
    %cst_87 = arith.constant 2.000000e-01 : f32
    %189 = vector.broadcast %cst_87 : f32 to vector<32x128xf32>
    %190 = arith.mulf %189, %188 : vector<32x128xf32>
    %191 = arith.maximumf %188, %190 : vector<32x128xf32>
    %192 = arith.addf %167, %191 : vector<32x128xf32>
    %c7_i32 = arith.constant 7 : i32
    %193 = arith.index_cast %c7_i32 : i32 to index
    %c0_88 = arith.constant 0 : index
    %c0_89 = arith.constant 0 : index
    %194 = vector.load %arg2[%193, %c0_88, %c0_89] : memref<8x3x128xbf16, #tpu.memory_space<vmem>>, vector<1x3x128xbf16>
    %195 = vector.shape_cast %194 : vector<1x3x128xbf16> to vector<3x128xbf16>
    %cst_90 = arith.constant dense<0.000000e+00> : vector<16x128xf32>
    %196 = tpu.matmul %0, %195, %cst_90 {dimension_numbers = #tpu.dot_dimension_numbers<[1], [0], [0], [1], [0, 0, 1, 1], [], []>} : vector<16x3xbf16>, vector<3x128xbf16>, vector<16x128xf32> -> vector<16x128xf32>
    %197 = arith.index_cast %c7_i32 : i32 to index
    %c0_91 = arith.constant 0 : index
    %c0_92 = arith.constant 0 : index
    %198 = vector.load %arg3[%197, %c0_91, %c0_92] : memref<8x16x128xbf16, #tpu.memory_space<vmem>>, vector<1x16x128xbf16>
    %199 = vector.shape_cast %198 : vector<1x16x128xbf16> to vector<16x128xbf16>
    %200 = arith.addf %196, %10 : vector<16x128xf32>
    %201 = arith.truncf %200 : vector<16x128xf32> to vector<16x128xbf16>
    %202 = arith.addf %199, %201 : vector<16x128xbf16>
    %cst_93 = arith.constant 2.001950e-01 : bf16
    %203 = vector.broadcast %cst_93 : bf16 to vector<16x128xbf16>
    %204 = arith.mulf %203, %202 : vector<16x128xbf16>
    %205 = arith.maximumf %202, %204 : vector<16x128xbf16>
    %cst_94 = arith.constant dense<0.000000e+00> : vector<32x128xf32>
    %206 = tpu.matmul %1, %205, %cst_94 {dimension_numbers = #tpu.dot_dimension_numbers<[1], [0], [0], [1], [0, 0, 1, 1], [], []>} : vector<32x16xbf16>, vector<16x128xbf16>, vector<32x128xf32> -> vector<32x128xf32>
    %207 = arith.addf %206, %13 : vector<32x128xf32>
    %208 = arith.truncf %207 : vector<32x128xf32> to vector<32x128xbf16>
    %cst_95 = arith.constant 2.001950e-01 : bf16
    %209 = vector.broadcast %cst_95 : bf16 to vector<32x128xbf16>
    %210 = arith.mulf %209, %208 : vector<32x128xbf16>
    %211 = arith.maximumf %208, %210 : vector<32x128xbf16>
    %cst_96 = arith.constant dense<0.000000e+00> : vector<32x128xf32>
    %212 = tpu.matmul %2, %211, %cst_96 {dimension_numbers = #tpu.dot_dimension_numbers<[1], [0], [0], [1], [0, 0, 1, 1], [], []>} : vector<32x32xbf16>, vector<32x128xbf16>, vector<32x128xf32> -> vector<32x128xf32>
    %213 = arith.addf %212, %16 : vector<32x128xf32>
    %cst_97 = arith.constant 2.000000e-01 : f32
    %214 = vector.broadcast %cst_97 : f32 to vector<32x128xf32>
    %215 = arith.mulf %214, %213 : vector<32x128xf32>
    %216 = arith.maximumf %213, %215 : vector<32x128xf32>
    %217 = arith.addf %192, %216 : vector<32x128xf32>
    %c8_i32 = arith.constant 8 : i32
    %c0_98 = arith.constant 0 : index
    %c0_99 = arith.constant 0 : index
    %218 = vector.load %arg12[%c0_98, %c0_99] : memref<32x128xf32, #tpu.memory_space<vmem>>, vector<32x128xf32>
    tpu.vector_store %arg12[%c0_98, %c0_99], %217 {strides = array<i32>} : memref<32x128xf32, #tpu.memory_space<vmem>>, vector<32x128xf32>,
    return
  }
  func.func @transform_0(%arg0: i32) -> (i32, i32) {
    %c0_i32 = arith.constant 0 : i32
    %c0_i32_0 = arith.constant 0 : i32
    return %c0_i32, %arg0 : i32, i32
  }
  func.func @transform_1(%arg0: i32) -> (i32, i32, i32) {
    %c0_i32 = arith.constant 0 : i32
    %c0_i32_0 = arith.constant 0 : i32
    %c0_i32_1 = arith.constant 0 : i32
    return %c0_i32, %c0_i32_0, %arg0 : i32, i32, i32
  }
  func.func @transform_2(%arg0: i32) -> (i32, i32, i32) {
    %c0_i32 = arith.constant 0 : i32
    %c0_i32_0 = arith.constant 0 : i32
    %c0_i32_1 = arith.constant 0 : i32
    return %c0_i32, %c0_i32_0, %arg0 : i32, i32, i32
  }
  func.func @transform_3(%arg0: i32) -> (i32, i32) {
    %c0_i32 = arith.constant 0 : i32
    %c0_i32_0 = arith.constant 0 : i32
    return %c0_i32, %arg0 : i32, i32
  }
  func.func @transform_4(%arg0: i32) -> (i32, i32) {
    %c0_i32 = arith.constant 0 : i32
    %c0_i32_0 = arith.constant 0 : i32
    %c0_i32_1 = arith.constant 0 : i32
    return %c0_i32, %c0_i32_0 : i32, i32
  }
  func.func @transform_5(%arg0: i32) -> (i32, i32) {
    %c0_i32 = arith.constant 0 : i32
    %c0_i32_0 = arith.constant 0 : i32
    %c0_i32_1 = arith.constant 0 : i32
    return %c0_i32, %c0_i32_0 : i32, i32
  }
  func.func @transform_6(%arg0: i32) -> (i32, i32) {
    %c0_i32 = arith.constant 0 : i32
    %c0_i32_0 = arith.constant 0 : i32
    %c0_i32_1 = arith.constant 0 : i32
    return %c0_i32, %c0_i32_0 : i32, i32
  }
  func.func @transform_7(%arg0: i32) -> (i32, i32) {
    %c0_i32 = arith.constant 0 : i32
    %c0_i32_0 = arith.constant 0 : i32
    %c0_i32_1 = arith.constant 0 : i32
    return %c0_i32, %c0_i32_0 : i32, i32
  }
  func.func @transform_8(%arg0: i32) -> (i32, i32) {
    %c0_i32 = arith.constant 0 : i32
    %c0_i32_0 = arith.constant 0 : i32
    %c0_i32_1 = arith.constant 0 : i32
    return %c0_i32, %c0_i32_0 : i32, i32
  }
  func.func @transform_9(%arg0: i32) -> (i32, i32) {
    %c0_i32 = arith.constant 0 : i32
    %c0_i32_0 = arith.constant 0 : i32
    %c0_i32_1 = arith.constant 0 : i32
    return %c0_i32, %c0_i32_0 : i32, i32
  }
  func.func @transform_10(%arg0: i32) -> (i32, i32) {
    %c0_i32 = arith.constant 0 : i32
    %c0_i32_0 = arith.constant 0 : i32
    %c0_i32_1 = arith.constant 0 : i32
    return %c0_i32, %c0_i32_0 : i32, i32
  }
  func.func @transform_11(%arg0: i32) -> (i32, i32) {
    %c0_i32 = arith.constant 0 : i32
    %c0_i32_0 = arith.constant 0 : i32
    return %c0_i32, %arg0 : i32, i32
  }
}

</mosaic_0001>

<llo_original>
// kernel: tpu_custom_call.1
$region0: #{tpu_custom_call.1}
  #allocation0 [shape = 'u32[]', space=smem, size = 0x4, offset = 0x4, fixed_abs, tag = 'smem constant byte address 0x4 - core index']
  #allocation1 [shape = 'u32[144,128]{1,0:T(1,128)}', space=vmem, size = 0x12000, scoped, tag = 'internal scratch']
  %s0 = inlined_call_operand.vmem [shape: bf16[3,128], index: 0, kind: input, shape index: {}]
  %s1 = inlined_call_operand.vmem [shape: bf16[8,3,128], index: 1, kind: input, shape index: {}]
  %s2 = inlined_call_operand.vmem [shape: bf16[8,16,128], index: 2, kind: input, shape index: {}]
  %s3 = inlined_call_operand.vmem [shape: f32[16,128], index: 3, kind: input, shape index: {}]
  %s4 = inlined_call_operand.vmem [shape: bf16[16,3], index: 4, kind: input, shape index: {}]
  %s5 = inlined_call_operand.vmem [shape: bf16[16,3], index: 5, kind: input, shape index: {}]
  %s6 = inlined_call_operand.vmem [shape: f32[16,1], index: 6, kind: input, shape index: {}]
  %s7 = inlined_call_operand.vmem [shape: bf16[32,16], index: 7, kind: input, shape index: {}]
  %s8 = inlined_call_operand.vmem [shape: f32[32,1], index: 8, kind: input, shape index: {}]
  %s9 = inlined_call_operand.vmem [shape: bf16[32,32], index: 9, kind: input, shape index: {}]
  %s10 = inlined_call_operand.vmem [shape: f32[32,1], index: 10, kind: input, shape index: {}]
  %s11 = inlined_call_operand.hbm [shape: f32[32,128], index: 11, kind: output, shape index: {}]
  %s12 = sld [smem:[#allocation0]]
  $region54: #{tpu_custom_call.1} parent=0
    _
  %s14 = ssub.s32 1, %s12
  %s15 = scalar_select 0, %s14, %s12
  $region1: #{tpu_custom_call.1} parent=0
    #allocation2 [shape = 'u8[16384]{0}', space=vmem, size = 0x4000, scoped, tag = 'output window, operand 0, single buffered']
    #allocation3 [shape = 's32[1]{0}', space=sflag, size = 0x4, scoped, tag = 'scoped memory for tpu_custom_call.1']
    %16 = vsyncpa [#allocation3], 0
    // Predicated region
    $region2: #{tpu_custom_call.1} parent=1 // pred_check
      _
    $region3: #{tpu_custom_call.1} parent=1 // pred_check_branch
      %18 = sbr.rel (0) target = $region5
    $region4: #{tpu_custom_call.1} parent=1 // pred_region
      _
    $region5: #{tpu_custom_call.1} parent=1 // pred_fallthru
      _
    // Predicated region
    $region6: #{tpu_custom_call.1} parent=1 // pred_check
      _
    $region7: #{tpu_custom_call.1} parent=1 // pred_check_branch
      %20 = sbr.rel (0) target = $region9
    $region8: #{tpu_custom_call.1} parent=1 // pred_region
      _
    $region9: #{tpu_custom_call.1} parent=1 // pred_fallthru
      _
    // Predicated region
    $region10: #{tpu_custom_call.1} parent=1 // pred_check
      _
    $region11: #{tpu_custom_call.1} parent=1 // pred_check_branch
      %22 = sbr.rel (0) target = $region13
    $region12: #{tpu_custom_call.1} parent=1 // pred_region
      _
    $region13: #{tpu_custom_call.1} parent=1 // pred_fallthru
      _
    // Predicated region
    $region14: #{tpu_custom_call.1} parent=1 // pred_check
      _
    $region15: #{tpu_custom_call.1} parent=1 // pred_check_branch
      %24 = sbr.rel (0) target = $region17
    $region16: #{tpu_custom_call.1} parent=1 // pred_region
      _
    $region17: #{tpu_custom_call.1} parent=1 // pred_fallthru
      _
    // Predicated region
    $region18: #{tpu_custom_call.1} parent=1 // pred_check
      _
    $region19: #{tpu_custom_call.1} parent=1 // pred_check_branch
      %26 = sbr.rel (0) target = $region21
    $region20: #{tpu_custom_call.1} parent=1 // pred_region
      _
    $region21: #{tpu_custom_call.1} parent=1 // pred_fallthru
      _
    // Predicated region
    $region22: #{tpu_custom_call.1} parent=1 // pred_check
      _
    $region23: #{tpu_custom_call.1} parent=1 // pred_check_branch
      %28 = sbr.rel (0) target = $region25
    $region24: #{tpu_custom_call.1} parent=1 // pred_region
      _
    $region25: #{tpu_custom_call.1} parent=1 // pred_fallthru
      _
    // Predicated region
    $region26: #{tpu_custom_call.1} parent=1 // pred_check
      _
    $region27: #{tpu_custom_call.1} parent=1 // pred_check_branch
      %30 = sbr.rel (0) target = $region29
    $region28: #{tpu_custom_call.1} parent=1 // pred_region
      _
    $region29: #{tpu_custom_call.1} parent=1 // pred_fallthru
      _
    // Predicated region
    $region30: #{tpu_custom_call.1} parent=1 // pred_check
      _
    $region31: #{tpu_custom_call.1} parent=1 // pred_check_branch
      %32 = sbr.rel (0) target = $region33
    $region32: #{tpu_custom_call.1} parent=1 // pred_region
      _
    $region33: #{tpu_custom_call.1} parent=1 // pred_fallthru
      _
    // Predicated region
    $region34: #{tpu_custom_call.1} parent=1 // pred_check
      _
    $region35: #{tpu_custom_call.1} parent=1 // pred_check_branch
      %34 = sbr.rel (0) target = $region37
    $region36: #{tpu_custom_call.1} parent=1 // pred_region
      _
    $region37: #{tpu_custom_call.1} parent=1 // pred_fallthru
      _
    // Predicated region
    $region38: #{tpu_custom_call.1} parent=1 // pred_check
      _
    $region39: #{tpu_custom_call.1} parent=1 // pred_check_branch
      %36 = sbr.rel (0) target = $region41
    $region40: #{tpu_custom_call.1} parent=1 // pred_region
      _
    $region41: #{tpu_custom_call.1} parent=1 // pred_fallthru
      _
    // Predicated region
    $region42: #{tpu_custom_call.1} parent=1 // pred_check
      _
    $region43: #{tpu_custom_call.1} parent=1 // pred_check_branch
      %38 = sbr.rel (0) target = $region45
    $region44: #{tpu_custom_call.1} parent=1 // pred_region
      _
    $region45: #{tpu_custom_call.1} parent=1 // pred_fallthru
      _
    %v41 = vld [vmem:[%s5] sm:$0xf]
    %v42 = vld [vmem:[%s5 + $0x4] sm:$0xf]
    %v43 = vld [vmem:[%s7] sm:$0xf]
    %v44 = vld [vmem:[%s7 + $0x4] sm:$0xf]
    %v45 = vld [vmem:[%s7 + $0x8] sm:$0xf]
    %v46 = vld [vmem:[%s7 + $0xc] sm:$0xf]
    %v47 = vld [vmem:[%s9] sm:$0xf]
    %v48 = vld [vmem:[%s9 + $0x4] sm:$0xf]
    %v49 = vld [vmem:[%s9 + $0x8] sm:$0xf]
    %v50 = vld [vmem:[%s9 + $0xc] sm:$0xf]
    %v51 = vld [vmem:[%s4] sm:$0xf]
    %v52 = vld [vmem:[%s4 + $0x4] sm:$0xf]
    %v53 = vld [vmem:[%s0] sm:$0x3]
    %v54 = vld [vmem:[%s6] sm:$0xff]
    %v55 = vld [vmem:[%s6 + $0x8] sm:$0xff]
    %57 = vset.pattern.permute.xlu0 0
    %58 = vperm.xlu0 %57, %v54
    %v59 = vpop.permute.xlu0 %58
    %62 = vset.pattern.permute.xlu0 0
    %63 = vperm.xlu0 %62, %v55
    %v64 = vpop.permute.xlu0 %63
    %v68 = vunpack.c.l.b16 %v51
    %v69 = vunpack.c.l.b16 %v52
    %v70 = vpack.c.b16 %v69, %v68
    %vm71 = vcmask 23552
    %v73 = vsel %vm71, %v70, 0
    %vm75 = vcmask 1040384
    %vm76 = vcmask 1041408
    %v77 = vsel %vm75, 4294967295, 65535
    %v78 = vsel %vm76, %v77, 0
    %v80 = vand.u32 %v53, %v78
    %82 = vmatprep.subr.bf16.mxu0 0
    %83 = vmatpush1.bf16.msra.mxu0 %v80
    %84 = vmatprep.subr.bf16.mxu0 0
    %85 = vmatpush1.bf16.msra.mxu0 0
    %86 = vmatprep.subr.bf16.mxu0 0
    %87 = vmatpush1.bf16.msra.mxu0 0
    %88 = vmatprep.subr.bf16.mxu0 0
    %89 = vmatpush1.bf16.msra.mxu0 0
    %90 = vmatprep.subr.bf16.mxu0 0
    %91 = vmatpush1.bf16.msra.mxu0 0
    %92 = vmatprep.subr.bf16.mxu0 0
    %93 = vmatpush1.bf16.msra.mxu0 0
    %94 = vmatprep.subr.bf16.mxu0 0
    %95 = vmatpush1.bf16.msra.mxu0 0
    %96 = vmatprep.subr.bf16.mxu0 0
    %97 = vmatpush1.bf16.msra.mxu0 0
    %98 = vmatprep.subr.bf16.mxu0 0
    %99 = vmatpush1.bf16.msra.mxu0 0
    %100 = vmatprep.subr.bf16.mxu0 0
    %101 = vmatpush1.bf16.msra.mxu0 0
    %102 = vmatprep.subr.bf16.mxu0 0
    %103 = vmatpush1.bf16.msra.mxu0 0
    %104 = vmatprep.subr.bf16.mxu0 0
    %105 = vmatpush1.bf16.msra.mxu0 0
    %106 = vmatprep.subr.bf16.mxu0 0
    %107 = vmatpush1.bf16.msra.mxu0 0
    %108 = vmatprep.subr.bf16.mxu0 0
    %109 = vmatpush1.bf16.msra.mxu0 0
    %110 = vmatprep.subr.bf16.mxu0 0
    %111 = vmatpush1.bf16.msra.mxu0 0
    %112 = vmatprep.subr.bf16.mxu0 0
    %113 = vmatpush1.bf16.msra.mxu0 0
    %114 = vmatprep.mubr.bf16.mxu0 0
    %115 = vmatmul.mubr.bf16.gmra.mrb[0].mxu0 %v73
    %v116 = vpop.f32.mrb[0].mxu0
    %v117 = vadd.f32 %v59, %v116
    %v118 = vpop.f32.mrb[0].mxu0
    %v119 = vpop.f32.mrb[0].mxu0
    %v120 = vadd.f32 %v64, %v119
    %v121 = vpop.f32.mrb[0].mxu0
    %122 = vdwg.mxu0
    %v123 = vld [vmem:[%s3] sm:$0xff]
    %v124 = vld [vmem:[%s3 + $0x8] sm:$0xff]
    %v125 = vsub.f32 %v117, %v123
    %v126 = vsub.f32 %v120, %v124
    %v127 = vld [vmem:[%s8] sm:$0xff]
    %v128 = vld [vmem:[%s8 + $0x8] sm:$0xff]
    %v129 = vld [vmem:[%s8 + $0x10] sm:$0xff]
    %v130 = vld [vmem:[%s8 + $0x18] sm:$0xff]
    %132 = vset.pattern.permute.xlu0 0
    %133 = vperm.xlu0 %132, %v127
    %v134 = vpop.permute.xlu0 %133
    %137 = vset.pattern.permute.xlu0 0
    %138 = vperm.xlu0 %137, %v128
    %v139 = vpop.permute.xlu0 %138
    %142 = vset.pattern.permute.xlu0 0
    %143 = vperm.xlu0 %142, %v129
    %v144 = vpop.permute.xlu0 %143
    %147 = vset.pattern.permute.xlu0 0
    %148 = vperm.xlu0 %147, %v130
    %v149 = vpop.permute.xlu0 %148
    %v151 = vld [vmem:[%s10] sm:$0xff]
    %v152 = vld [vmem:[%s10 + $0x8] sm:$0xff]
    %v153 = vld [vmem:[%s10 + $0x10] sm:$0xff]
    %v154 = vld [vmem:[%s10 + $0x18] sm:$0xff]
    %156 = vset.pattern.permute.xlu0 0
    %157 = vperm.xlu0 %156, %v151
    %v158 = vpop.permute.xlu0 %157
    %161 = vset.pattern.permute.xlu0 0
    %162 = vperm.xlu0 %161, %v152
    %v163 = vpop.permute.xlu0 %162
    %166 = vset.pattern.permute.xlu0 0
    %167 = vperm.xlu0 %166, %v153
    %v168 = vpop.permute.xlu0 %167
    %171 = vset.pattern.permute.xlu0 0
    %172 = vperm.xlu0 %171, %v154
    %v173 = vpop.permute.xlu0 %172
    %v175 = vld [vmem:[%s1] sm:$0x3]
    %v176 = vld [vmem:[%s2] sm:$0xf]
    %v177 = vld [vmem:[%s2 + $0x4] sm:$0xf]
    %v180 = vunpack.c.l.b16 %v41
    %v181 = vunpack.c.l.b16 %v42
    %v182 = vpack.c.b16 %v181, %v180
    %v184 = vsel %vm71, %v182, 0
    %v187 = vand.u32 %v175, %v78
    %189 = vmatprep.subr.bf16.mxu0 0
    %190 = vmatpush1.bf16.msra.mxu0 %v187
    %191 = vmatprep.subr.bf16.mxu0 0
    %192 = vmatpush1.bf16.msra.mxu0 0
    %193 = vmatprep.subr.bf16.mxu0 0
    %194 = vmatpush1.bf16.msra.mxu0 0
    %195 = vmatprep.subr.bf16.mxu0 0
    %196 = vmatpush1.bf16.msra.mxu0 0
    %197 = vmatprep.subr.bf16.mxu0 0
    %198 = vmatpush1.bf16.msra.mxu0 0
    %199 = vmatprep.subr.bf16.mxu0 0
    %200 = vmatpush1.bf16.msra.mxu0 0
    %201 = vmatprep.subr.bf16.mxu0 0
    %202 = vmatpush1.bf16.msra.mxu0 0
    %203 = vmatprep.subr.bf16.mxu0 0
    %204 = vmatpush1.bf16.msra.mxu0 0
    %205 = vmatprep.subr.bf16.mxu0 0
    %206 = vmatpush1.bf16.msra.mxu0 0
    %207 = vmatprep.subr.bf16.mxu0 0
    %208 = vmatpush1.bf16.msra.mxu0 0
    %209 = vmatprep.subr.bf16.mxu0 0
    %210 = vmatpush1.bf16.msra.mxu0 0
    %211 = vmatprep.subr.bf16.mxu0 0
    %212 = vmatpush1.bf16.msra.mxu0 0
    %213 = vmatprep.subr.bf16.mxu0 0
    %214 = vmatpush1.bf16.msra.mxu0 0
    %215 = vmatprep.subr.bf16.mxu0 0
    %216 = vmatpush1.bf16.msra.mxu0 0
    %217 = vmatprep.subr.bf16.mxu0 0
    %218 = vmatpush1.bf16.msra.mxu0 0
    %219 = vmatprep.subr.bf16.mxu0 0
    %220 = vmatpush1.bf16.msra.mxu0 0
    %221 = vmatprep.mubr.bf16.mxu0 0
    %222 = vmatmul.mubr.bf16.gmra.mrb[0].mxu0 %v184
    %v223 = vpop.f32.mrb[0].mxu0
    %v224 = vadd.f32 %v125, %v223
    %v225 = vpop.f32.mrb[0].mxu0
    %v226 = vpop.f32.mrb[0].mxu0
    %v227 = vadd.f32 %v126, %v226
    %v228 = vpop.f32.mrb[0].mxu0
    %229 = vdwg.mxu0
    %v230 = vpack.c.bf16 %v227, %v224
    %v232 = vunpack.c.l.b16 %v230
    %v233 = vunpack.c.h.b16 %v230
    %v234 = vpack.c.b16 %v232, %v232
    %v235 = vpack.c.b16 %v233, %v233
    %v238 = vadd.bf16 %v176, %v234
    %v239 = vadd.bf16 %v177, %v235
    %v240 = vmul.bf16 %v238, 1045249613
    %v241 = vmul.bf16 %v239, 1045249613
    %v242 = vmax.bf16 %v238, %v240
    %v243 = vmax.bf16 %v239, %v241
    %v248 = vunpack.c.l.b16 %v43
    %v249 = vunpack.c.l.b16 %v44
    %v250 = vunpack.c.l.b16 %v45
    %v251 = vunpack.c.l.b16 %v46
    %v252 = vpack.c.b16 %v249, %v248
    %v253 = vpack.c.b16 %v251, %v250
    %v256 = vunpack.c.l.b16 %v242
    %v257 = vunpack.c.l.b16 %v243
    %v258 = vpack.c.b16 %v257, %v256
    %vm260 = vcmask 130048
    %v262 = vsel %vm260, %v252, 0
    %v265 = vsel %vm260, %v253, 0
    %267 = vmatprep.subr.bf16.mxu0 0
    %268 = vmatpush1.bf16.msra.mxu0 %v258
    %269 = vmatprep.subr.bf16.mxu0 0
    %270 = vmatpush1.bf16.msra.mxu0 0
    %271 = vmatprep.subr.bf16.mxu0 0
    %272 = vmatpush1.bf16.msra.mxu0 0
    %273 = vmatprep.subr.bf16.mxu0 0
    %274 = vmatpush1.bf16.msra.mxu0 0
    %275 = vmatprep.subr.bf16.mxu0 0
    %276 = vmatpush1.bf16.msra.mxu0 0
    %277 = vmatprep.subr.bf16.mxu0 0
    %278 = vmatpush1.bf16.msra.mxu0 0
    %279 = vmatprep.subr.bf16.mxu0 0
    %280 = vmatpush1.bf16.msra.mxu0 0
    %281 = vmatprep.subr.bf16.mxu0 0
    %282 = vmatpush1.bf16.msra.mxu0 0
    %283 = vmatprep.subr.bf16.mxu0 0
    %284 = vmatpush1.bf16.msra.mxu0 0
    %285 = vmatprep.subr.bf16.mxu0 0
    %286 = vmatpush1.bf16.msra.mxu0 0
    %287 = vmatprep.subr.bf16.mxu0 0
    %288 = vmatpush1.bf16.msra.mxu0 0
    %289 = vmatprep.subr.bf16.mxu0 0
    %290 = vmatpush1.bf16.msra.mxu0 0
    %291 = vmatprep.subr.bf16.mxu0 0
    %292 = vmatpush1.bf16.msra.mxu0 0
    %293 = vmatprep.subr.bf16.mxu0 0
    %294 = vmatpush1.bf16.msra.mxu0 0
    %295 = vmatprep.subr.bf16.mxu0 0
    %296 = vmatpush1.bf16.msra.mxu0 0
    %297 = vmatprep.subr.bf16.mxu0 0
    %298 = vmatpush1.bf16.msra.mxu0 0
    %299 = vmatprep.mubr.bf16.mxu0 0
    %300 = vmatmul.mubr.bf16.gmra.mrb[0].mxu0 %v262
    %v301 = vpop.f32.mrb[0].mxu0
    %v302 = vadd.f32 %v134, %v301
    %v303 = vpop.f32.mrb[0].mxu0
    %v304 = vpop.f32.mrb[0].mxu0
    %v305 = vadd.f32 %v139, %v304
    %v306 = vpop.f32.mrb[0].mxu0
    %307 = vmatprep.mubr.bf16.mxu0 0
    %308 = vmatmul.mubr.bf16.gmra.mrb[0].mxu0 %v265
    %v309 = vpop.f32.mrb[0].mxu0
    %v310 = vadd.f32 %v144, %v309
    %v311 = vpop.f32.mrb[0].mxu0
    %v312 = vpop.f32.mrb[0].mxu0
    %v313 = vadd.f32 %v149, %v312
    %v314 = vpop.f32.mrb[0].mxu0
    %315 = vdwg.mxu0
    %v316 = vpack.c.bf16 %v305, %v302
    %v317 = vpack.c.bf16 %v313, %v310
    %v318 = vmul.bf16 %v316, 1045249613
    %v319 = vmul.bf16 %v317, 1045249613
    %v320 = vmax.bf16 %v316, %v318
    %v321 = vmax.bf16 %v317, %v319
    %v326 = vunpack.c.l.b16 %v47
    %v327 = vunpack.c.l.b16 %v48
    %v328 = vunpack.c.l.b16 %v49
    %v329 = vunpack.c.l.b16 %v50
    %v330 = vpack.c.b16 %v327, %v326
    %v331 = vpack.c.b16 %v329, %v328
    %vm332 = vcmask 261120
    %v334 = vsel %vm332, %v330, 0
    %v337 = vsel %vm332, %v331, 0
    %339 = vmatprep.subr.bf16.mxu0 0
    %340 = vmatpush1.bf16.msra.mxu0 %v320
    %341 = vmatprep.subr.bf16.mxu0 0
    %342 = vmatpush1.bf16.msra.mxu0 %v321
    %343 = vmatprep.subr.bf16.mxu0 0
    %344 = vmatpush1.bf16.msra.mxu0 0
    %345 = vmatprep.subr.bf16.mxu0 0
    %346 = vmatpush1.bf16.msra.mxu0 0
    %347 = vmatprep.subr.bf16.mxu0 0
    %348 = vmatpush1.bf16.msra.mxu0 0
    %349 = vmatprep.subr.bf16.mxu0 0
    %350 = vmatpush1.bf16.msra.mxu0 0
    %351 = vmatprep.subr.bf16.mxu0 0
    %352 = vmatpush1.bf16.msra.mxu0 0
    %353 = vmatprep.subr.bf16.mxu0 0
    %354 = vmatpush1.bf16.msra.mxu0 0
    %355 = vmatprep.subr.bf16.mxu0 0
    %356 = vmatpush1.bf16.msra.mxu0 0
    %357 = vmatprep.subr.bf16.mxu0 0
    %358 = vmatpush1.bf16.msra.mxu0 0
    %359 = vmatprep.subr.bf16.mxu0 0
    %360 = vmatpush1.bf16.msra.mxu0 0
    %361 = vmatprep.subr.bf16.mxu0 0
    %362 = vmatpush1.bf16.msra.mxu0 0
    %363 = vmatprep.subr.bf16.mxu0 0
    %364 = vmatpush1.bf16.msra.mxu0 0
    %365 = vmatprep.subr.bf16.mxu0 0
    %366 = vmatpush1.bf16.msra.mxu0 0
    %367 = vmatprep.subr.bf16.mxu0 0
    %368 = vmatpush1.bf16.msra.mxu0 0
    %369 = vmatprep.subr.bf16.mxu0 0
    %370 = vmatpush1.bf16.msra.mxu0 0
    %371 = vmatprep.mubr.bf16.mxu0 0
    %372 = vmatmul.mubr.bf16.gmra.mrb[0].mxu0 %v334
    %v373 = vpop.f32.mrb[0].mxu0
    %v374 = vadd.f32 %v158, %v373
    %v375 = vpop.f32.mrb[0].mxu0
    %v376 = vpop.f32.mrb[0].mxu0
    %v377 = vadd.f32 %v163, %v376
    %v378 = vpop.f32.mrb[0].mxu0
    %379 = vmatprep.mubr.bf16.mxu0 0
    %380 = vmatmul.mubr.bf16.gmra.mrb[0].mxu0 %v337
    %v381 = vpop.f32.mrb[0].mxu0
    %v382 = vadd.f32 %v168, %v381
    %v383 = vpop.f32.mrb[0].mxu0
    %v384 = vpop.f32.mrb[0].mxu0
    %v385 = vadd.f32 %v173, %v384
    %v386 = vpop.f32.mrb[0].mxu0
    %387 = vdwg.mxu0
    %v388 = vmul.f32 %v374, 0.2
    %v389 = vmul.f32 %v377, 0.2
    %v390 = vmul.f32 %v382, 0.2
    %v391 = vmul.f32 %v385, 0.2
    %v392 = vmax.f32 %v374, %v388
    %v393 = vmax.f32 %v377, %v389
    %v394 = vmax.f32 %v382, %v390
    %v395 = vmax.f32 %v385, %v391
    %v396 = vadd.f32 %v392, 0.0
    %v397 = vadd.f32 %v393, 0.0
    %v398 = vadd.f32 %v394, 0.0
    %v399 = vadd.f32 %v395, 0.0
    %s400 = scalar_lea.vmem %s1, 2
    %v401 = vld [vmem:[%s400] sm:$0x3]
    %s402 = scalar_lea.vmem %s2, 8
    %v403 = vld [vmem:[%s402] sm:$0xf]
    %v404 = vld [vmem:[%s402 + $0x4] sm:$0xf]
    %v406 = vand.u32 %v401, %v78
    %408 = vmatprep.subr.bf16.mxu0 0
    %409 = vmatpush1.bf16.msra.mxu0 %v406
    %410 = vmatprep.subr.bf16.mxu0 0
    %411 = vmatpush1.bf16.msra.mxu0 0
    %412 = vmatprep.subr.bf16.mxu0 0
    %413 = vmatpush1.bf16.msra.mxu0 0
    %414 = vmatprep.subr.bf16.mxu0 0
    %415 = vmatpush1.bf16.msra.mxu0 0
    %416 = vmatprep.subr.bf16.mxu0 0
    %417 = vmatpush1.bf16.msra.mxu0 0
    %418 = vmatprep.subr.bf16.mxu0 0
    %419 = vmatpush1.bf16.msra.mxu0 0
    %420 = vmatprep.subr.bf16.mxu0 0
    %421 = vmatpush1.bf16.msra.mxu0 0
    %422 = vmatprep.subr.bf16.mxu0 0
    %423 = vmatpush1.bf16.msra.mxu0 0
    %424 = vmatprep.subr.bf16.mxu0 0
    %425 = vmatpush1.bf16.msra.mxu0 0
    %426 = vmatprep.subr.bf16.mxu0 0
    %427 = vmatpush1.bf16.msra.mxu0 0
    %428 = vmatprep.subr.bf16.mxu0 0
    %429 = vmatpush1.bf16.msra.mxu0 0
    %430 = vmatprep.subr.bf16.mxu0 0
    %431 = vmatpush1.bf16.msra.mxu0 0
    %432 = vmatprep.subr.bf16.mxu0 0
    %433 = vmatpush1.bf16.msra.mxu0 0
    %434 = vmatprep.subr.bf16.mxu0 0
    %435 = vmatpush1.bf16.msra.mxu0 0
    %436 = vmatprep.subr.bf16.mxu0 0
    %437 = vmatpush1.bf16.msra.mxu0 0
    %438 = vmatprep.subr.bf16.mxu0 0
    %439 = vmatpush1.bf16.msra.mxu0 0
    %440 = vmatprep.mubr.bf16.mxu0 0
    %441 = vmatmul.mubr.bf16.gmra.mrb[0].mxu0 %v184
    %v442 = vpop.f32.mrb[0].mxu0
    %v443 = vadd.f32 %v125, %v442
    %v444 = vpop.f32.mrb[0].mxu0
    %v445 = vpop.f32.mrb[0].mxu0
    %v446 = vadd.f32 %v126, %v445
    %v447 = vpop.f32.mrb[0].mxu0
    %448 = vdwg.mxu0
    %v449 = vpack.c.bf16 %v446, %v443
    %v451 = vunpack.c.l.b16 %v449
    %v452 = vunpack.c.h.b16 %v449
    %v453 = vpack.c.b16 %v451, %v451
    %v454 = vpack.c.b16 %v452, %v452
    %v457 = vadd.bf16 %v403, %v453
    %v458 = vadd.bf16 %v404, %v454
    %v459 = vmul.bf16 %v457, 1045249613
    %v460 = vmul.bf16 %v458, 1045249613
    %v461 = vmax.bf16 %v457, %v459
    %v462 = vmax.bf16 %v458, %v460
    %v465 = vunpack.c.l.b16 %v461
    %v466 = vunpack.c.l.b16 %v462
    %v467 = vpack.c.b16 %v466, %v465
    %469 = vmatprep.subr.bf16.mxu0 0
    %470 = vmatpush1.bf16.msra.mxu0 %v467
    %471 = vmatprep.subr.bf16.mxu0 0
    %472 = vmatpush1.bf16.msra.mxu0 0
    %473 = vmatprep.subr.bf16.mxu0 0
    %474 = vmatpush1.bf16.msra.mxu0 0
    %475 = vmatprep.subr.bf16.mxu0 0
    %476 = vmatpush1.bf16.msra.mxu0 0
    %477 = vmatprep.subr.bf16.mxu0 0
    %478 = vmatpush1.bf16.msra.mxu0 0
    %479 = vmatprep.subr.bf16.mxu0 0
    %480 = vmatpush1.bf16.msra.mxu0 0
    %481 = vmatprep.subr.bf16.mxu0 0
    %482 = vmatpush1.bf16.msra.mxu0 0
    %483 = vmatprep.subr.bf16.mxu0 0
    %484 = vmatpush1.bf16.msra.mxu0 0
    %485 = vmatprep.subr.bf16.mxu0 0
    %486 = vmatpush1.bf16.msra.mxu0 0
    %487 = vmatprep.subr.bf16.mxu0 0
    %488 = vmatpush1.bf16.msra.mxu0 0
    %489 = vmatprep.subr.bf16.mxu0 0
    %490 = vmatpush1.bf16.msra.mxu0 0
    %491 = vmatprep.subr.bf16.mxu0 0
    %492 = vmatpush1.bf16.msra.mxu0 0
    %493 = vmatprep.subr.bf16.mxu0 0
    %494 = vmatpush1.bf16.msra.mxu0 0
    %495 = vmatprep.subr.bf16.mxu0 0
    %496 = vmatpush1.bf16.msra.mxu0 0
    %497 = vmatprep.subr.bf16.mxu0 0
    %498 = vmatpush1.bf16.msra.mxu0 0
    %499 = vmatprep.subr.bf16.mxu0 0
    %500 = vmatpush1.bf16.msra.mxu0 0
    %501 = vmatprep.mubr.bf16.mxu0 0
    %502 = vmatmul.mubr.bf16.gmra.mrb[0].mxu0 %v262
    %v503 = vpop.f32.mrb[0].mxu0
    %v504 = vadd.f32 %v134, %v503
    %v505 = vpop.f32.mrb[0].mxu0
    %v506 = vpop.f32.mrb[0].mxu0
    %v507 = vadd.f32 %v139, %v506
    %v508 = vpop.f32.mrb[0].mxu0
    %509 = vmatprep.mubr.bf16.mxu0 0
    %510 = vmatmul.mubr.bf16.gmra.mrb[0].mxu0 %v265
    %v511 = vpop.f32.mrb[0].mxu0
    %v512 = vadd.f32 %v144, %v511
    %v513 = vpop.f32.mrb[0].mxu0
    %v514 = vpop.f32.mrb[0].mxu0
    %v515 = vadd.f32 %v149, %v514
    %v516 = vpop.f32.mrb[0].mxu0
    %517 = vdwg.mxu0
    %v518 = vpack.c.bf16 %v507, %v504
    %v519 = vpack.c.bf16 %v515, %v512
    %v520 = vmul.bf16 %v518, 1045249613
    %v521 = vmul.bf16 %v519, 1045249613
    %v522 = vmax.bf16 %v518, %v520
    %v523 = vmax.bf16 %v519, %v521
    %524 = vmatprep.subr.bf16.mxu0 0
    %525 = vmatpush1.bf16.msra.mxu0 %v522
    %526 = vmatprep.subr.bf16.mxu0 0
    %527 = vmatpush1.bf16.msra.mxu0 %v523
    %528 = vmatprep.subr.bf16.mxu0 0
    %529 = vmatpush1.bf16.msra.mxu0 0
    %530 = vmatprep.subr.bf16.mxu0 0
    %531 = vmatpush1.bf16.msra.mxu0 0
    %532 = vmatprep.subr.bf16.mxu0 0
    %533 = vmatpush1.bf16.msra.mxu0 0
    %534 = vmatprep.subr.bf16.mxu0 0
    %535 = vmatpush1.bf16.msra.mxu0 0
    %536 = vmatprep.subr.bf16.mxu0 0
    %537 = vmatpush1.bf16.msra.mxu0 0
    %538 = vmatprep.subr.bf16.mxu0 0
    %539 = vmatpush1.bf16.msra.mxu0 0
    %540 = vmatprep.subr.bf16.mxu0 0
    %541 = vmatpush1.bf16.msra.mxu0 0
    %542 = vmatprep.subr.bf16.mxu0 0
    %543 = vmatpush1.bf16.msra.mxu0 0
    %544 = vmatprep.subr.bf16.mxu0 0
    %545 = vmatpush1.bf16.msra.mxu0 0
    %546 = vmatprep.subr.bf16.mxu0 0
    %547 = vmatpush1.bf16.msra.mxu0 0
    %548 = vmatprep.subr.bf16.mxu0 0
    %549 = vmatpush1.bf16.msra.mxu0 0
    %550 = vmatprep.subr.bf16.mxu0 0
    %551 = vmatpush1.bf16.msra.mxu0 0
    %552 = vmatprep.subr.bf16.mxu0 0
    %553 = vmatpush1.bf16.msra.mxu0 0
    %554 = vmatprep.subr.bf16.mxu0 0
    %555 = vmatpush1.bf16.msra.mxu0 0
    %556 = vmatprep.mubr.bf16.mxu0 0
    %557 = vmatmul.mubr.bf16.gmra.mrb[0].mxu0 %v334
    %v558 = vpop.f32.mrb[0].mxu0
    %v559 = vadd.f32 %v158, %v558
    %v560 = vpop.f32.mrb[0].mxu0
    %v561 = vpop.f32.mrb[0].mxu0
    %v562 = vadd.f32 %v163, %v561
    %v563 = vpop.f32.mrb[0].mxu0
    %564 = vmatprep.mubr.bf16.mxu0 0
    %565 = vmatmul.mubr.bf16.gmra.mrb[0].mxu0 %v337
    %v566 = vpop.f32.mrb[0].mxu0
    %v567 = vadd.f32 %v168, %v566
    %v568 = vpop.f32.mrb[0].mxu0
    %v569 = vpop.f32.mrb[0].mxu0
    %v570 = vadd.f32 %v173, %v569
    %v571 = vpop.f32.mrb[0].mxu0
    %572 = vdwg.mxu0
    %v573 = vmul.f32 %v559, 0.2
    %v574 = vmul.f32 %v562, 0.2
    %v575 = vmul.f32 %v567, 0.2
    %v576 = vmul.f32 %v570, 0.2
    %v577 = vmax.f32 %v559, %v573
    %v578 = vmax.f32 %v562, %v574
    %v579 = vmax.f32 %v567, %v575
    %v580 = vmax.f32 %v570, %v576
    %v581 = vadd.f32 %v396, %v577
    %v582 = vadd.f32 %v397, %v578
    %v583 = vadd.f32 %v398, %v579
    %v584 = vadd.f32 %v399, %v580
    %s585 = scalar_lea.vmem %s1, 4
    %v586 = vld [vmem:[%s585] sm:$0x3]
    %s587 = scalar_lea.vmem %s2, 16
    %v588 = vld [vmem:[%s587] sm:$0xf]
    %v589 = vld [vmem:[%s587 + $0x4] sm:$0xf]
    %v591 = vand.u32 %v586, %v78
    %593 = vmatprep.subr.bf16.mxu0 0
    %594 = vmatpush1.bf16.msra.mxu0 %v591
    %595 = vmatprep.subr.bf16.mxu0 0
    %596 = vmatpush1.bf16.msra.mxu0 0
    %597 = vmatprep.subr.bf16.mxu0 0
    %598 = vmatpush1.bf16.msra.mxu0 0
    %599 = vmatprep.subr.bf16.mxu0 0
    %600 = vmatpush1.bf16.msra.mxu0 0
    %601 = vmatprep.subr.bf16.mxu0 0
    %602 = vmatpush1.bf16.msra.mxu0 0
    %603 = vmatprep.subr.bf16.mxu0 0
    %604 = vmatpush1.bf16.msra.mxu0 0
    %605 = vmatprep.subr.bf16.mxu0 0
    %606 = vmatpush1.bf16.msra.mxu0 0
    %607 = vmatprep.subr.bf16.mxu0 0
    %608 = vmatpush1.bf16.msra.mxu0 0
    %609 = vmatprep.subr.bf16.mxu0 0
    %610 = vmatpush1.bf16.msra.mxu0 0
    %611 = vmatprep.subr.bf16.mxu0 0
    %612 = vmatpush1.bf16.msra.mxu0 0
    %613 = vmatprep.subr.bf16.mxu0 0
    %614 = vmatpush1.bf16.msra.mxu0 0
    %615 = vmatprep.subr.bf16.mxu0 0
    %616 = vmatpush1.bf16.msra.mxu0 0
    %617 = vmatprep.subr.bf16.mxu0 0
    %618 = vmatpush1.bf16.msra.mxu0 0
    %619 = vmatprep.subr.bf16.mxu0 0
    %620 = vmatpush1.bf16.msra.mxu0 0
    %621 = vmatprep.subr.bf16.mxu0 0
    %622 = vmatpush1.bf16.msra.mxu0 0
    %623 = vmatprep.subr.bf16.mxu0 0
    %624 = vmatpush1.bf16.msra.mxu0 0
    %625 = vmatprep.mubr.bf16.mxu0 0
    %626 = vmatmul.mubr.bf16.gmra.mrb[0].mxu0 %v184
    %v627 = vpop.f32.mrb[0].mxu0
    %v628 = vadd.f32 %v125, %v627
    %v629 = vpop.f32.mrb[0].mxu0
    %v630 = vpop.f32.mrb[0].mxu0
    %v631 = vadd.f32 %v126, %v630
    %v632 = vpop.f32.mrb[0].mxu0
    %633 = vdwg.mxu0
    %v634 = vpack.c.bf16 %v631, %v628
    %v636 = vunpack.c.l.b16 %v634
    %v637 = vunpack.c.h.b16 %v634
    %v638 = vpack.c.b16 %v636, %v636
    %v639 = vpack.c.b16 %v637, %v637
    %v642 = vadd.bf16 %v588, %v638
    %v643 = vadd.bf16 %v589, %v639
    %v644 = vmul.bf16 %v642, 1045249613
    %v645 = vmul.bf16 %v643, 1045249613
    %v646 = vmax.bf16 %v642, %v644
    %v647 = vmax.bf16 %v643, %v645
    %v650 = vunpack.c.l.b16 %v646
    %v651 = vunpack.c.l.b16 %v647
    %v652 = vpack.c.b16 %v651, %v650
    %654 = vmatprep.subr.bf16.mxu0 0
    %655 = vmatpush1.bf16.msra.mxu0 %v652
    %656 = vmatprep.subr.bf16.mxu0 0
    %657 = vmatpush1.bf16.msra.mxu0 0
    %658 = vmatprep.subr.bf16.mxu0 0
    %659 = vmatpush1.bf16.msra.mxu0 0
    %660 = vmatprep.subr.bf16.mxu0 0
    %661 = vmatpush1.bf16.msra.mxu0 0
    %662 = vmatprep.subr.bf16.mxu0 0
    %663 = vmatpush1.bf16.msra.mxu0 0
    %664 = vmatprep.subr.bf16.mxu0 0
    %665 = vmatpush1.bf16.msra.mxu0 0
    %666 = vmatprep.subr.bf16.mxu0 0
    %667 = vmatpush1.bf16.msra.mxu0 0
    %668 = vmatprep.subr.bf16.mxu0 0
    %669 = vmatpush1.bf16.msra.mxu0 0
    %670 = vmatprep.subr.bf16.mxu0 0
    %671 = vmatpush1.bf16.msra.mxu0 0
    %672 = vmatprep.subr.bf16.mxu0 0
    %673 = vmatpush1.bf16.msra.mxu0 0
    %674 = vmatprep.subr.bf16.mxu0 0
    %675 = vmatpush1.bf16.msra.mxu0 0
    %676 = vmatprep.subr.bf16.mxu0 0
    %677 = vmatpush1.bf16.msra.mxu0 0
    %678 = vmatprep.subr.bf16.mxu0 0
    %679 = vmatpush1.bf16.msra.mxu0 0
    %680 = vmatprep.subr.bf16.mxu0 0
    %681 = vmatpush1.bf16.msra.mxu0 0
    %682 = vmatprep.subr.bf16.mxu0 0
    %683 = vmatpush1.bf16.msra.mxu0 0
    %684 = vmatprep.subr.bf16.mxu0 0
    %685 = vmatpush1.bf16.msra.mxu0 0
    %686 = vmatprep.mubr.bf16.mxu0 0
    %687 = vmatmul.mubr.bf16.gmra.mrb[0].mxu0 %v262
    %v688 = vpop.f32.mrb[0].mxu0
    %v689 = vadd.f32 %v134, %v688
    %v690 = vpop.f32.mrb[0].mxu0
    %v691 = vpop.f32.mrb[0].mxu0
    %v692 = vadd.f32 %v139, %v691
    %v693 = vpop.f32.mrb[0].mxu0
    %694 = vmatprep.mubr.bf16.mxu0 0
    %695 = vmatmul.mubr.bf16.gmra.mrb[0].mxu0 %v265
    %v696 = vpop.f32.mrb[0].mxu0
    %v697 = vadd.f32 %v144, %v696
    %v698 = vpop.f32.mrb[0].mxu0
    %v699 = vpop.f32.mrb[0].mxu0
    %v700 = vadd.f32 %v149, %v699
    %v701 = vpop.f32.mrb[0].mxu0
    %702 = vdwg.mxu0
    %v703 = vpack.c.bf16 %v692, %v689
    %v704 = vpack.c.bf16 %v700, %v697
    %v705 = vmul.bf16 %v703, 1045249613
    %v706 = vmul.bf16 %v704, 1045249613
    %v707 = vmax.bf16 %v703, %v705
    %v708 = vmax.bf16 %v704, %v706
    %709 = vmatprep.subr.bf16.mxu0 0
    %710 = vmatpush1.bf16.msra.mxu0 %v707
    %711 = vmatprep.subr.bf16.mxu0 0
    %712 = vmatpush1.bf16.msra.mxu0 %v708
    %713 = vmatprep.subr.bf16.mxu0 0
    %714 = vmatpush1.bf16.msra.mxu0 0
    %715 = vmatprep.subr.bf16.mxu0 0
    %716 = vmatpush1.bf16.msra.mxu0 0
    %717 = vmatprep.subr.bf16.mxu0 0
    %718 = vmatpush1.bf16.msra.mxu0 0
    %719 = vmatprep.subr.bf16.mxu0 0
    %720 = vmatpush1.bf16.msra.mxu0 0
    %721 = vmatprep.subr.bf16.mxu0 0
    %722 = vmatpush1.bf16.msra.mxu0 0
    %723 = vmatprep.subr.bf16.mxu0 0
    %724 = vmatpush1.bf16.msra.mxu0 0
    %725 = vmatprep.subr.bf16.mxu0 0
    %726 = vmatpush1.bf16.msra.mxu0 0
    %727 = vmatprep.subr.bf16.mxu0 0
    %728 = vmatpush1.bf16.msra.mxu0 0
    %729 = vmatprep.subr.bf16.mxu0 0
    %730 = vmatpush1.bf16.msra.mxu0 0
    %731 = vmatprep.subr.bf16.mxu0 0
    %732 = vmatpush1.bf16.msra.mxu0 0
    %733 = vmatprep.subr.bf16.mxu0 0
    %734 = vmatpush1.bf16.msra.mxu0 0
    %735 = vmatprep.subr.bf16.mxu0 0
    %736 = vmatpush1.bf16.msra.mxu0 0
    %737 = vmatprep.subr.bf16.mxu0 0
    %738 = vmatpush1.bf16.msra.mxu0 0
    %739 = vmatprep.subr.bf16.mxu0 0
    %740 = vmatpush1.bf16.msra.mxu0 0
    %741 = vmatprep.mubr.bf16.mxu0 0
    %742 = vmatmul.mubr.bf16.gmra.mrb[0].mxu0 %v334
    %v743 = vpop.f32.mrb[0].mxu0
    %v744 = vadd.f32 %v158, %v743
    %v745 = vpop.f32.mrb[0].mxu0
    %v746 = vpop.f32.mrb[0].mxu0
    %v747 = vadd.f32 %v163, %v746
    %v748 = vpop.f32.mrb[0].mxu0
    %749 = vmatprep.mubr.bf16.mxu0 0
    %750 = vmatmul.mubr.bf16.gmra.mrb[0].mxu0 %v337
    %v751 = vpop.f32.mrb[0].mxu0
    %v752 = vadd.f32 %v168, %v751
    %v753 = vpop.f32.mrb[0].mxu0
    %v754 = vpop.f32.mrb[0].mxu0
    %v755 = vadd.f32 %v173, %v754
    %v756 = vpop.f32.mrb[0].mxu0
    %757 = vdwg.mxu0
    %v758 = vmul.f32 %v744, 0.2
    %v759 = vmul.f32 %v747, 0.2
    %v760 = vmul.f32 %v752, 0.2
    %v761 = vmul.f32 %v755, 0.2
    %v762 = vmax.f32 %v744, %v758
    %v763 = vmax.f32 %v747, %v759
    %v764 = vmax.f32 %v752, %v760
    %v765 = vmax.f32 %v755, %v761
    %v766 = vadd.f32 %v581, %v762
    %v767 = vadd.f32 %v582, %v763
    %v768 = vadd.f32 %v583, %v764
    %v769 = vadd.f32 %v584, %v765
    %s770 = scalar_lea.vmem %s1, 6
    %v771 = vld [vmem:[%s770] sm:$0x3]
    %s772 = scalar_lea.vmem %s2, 24
    %v773 = vld [vmem:[%s772] sm:$0xf]
    %v774 = vld [vmem:[%s772 + $0x4] sm:$0xf]
    %v776 = vand.u32 %v771, %v78
    %778 = vmatprep.subr.bf16.mxu0 0
    %779 = vmatpush1.bf16.msra.mxu0 %v776
    %780 = vmatprep.subr.bf16.mxu0 0
    %781 = vmatpush1.bf16.msra.mxu0 0
    %782 = vmatprep.subr.bf16.mxu0 0
    %783 = vmatpush1.bf16.msra.mxu0 0
    %784 = vmatprep.subr.bf16.mxu0 0
    %785 = vmatpush1.bf16.msra.mxu0 0
    %786 = vmatprep.subr.bf16.mxu0 0
    %787 = vmatpush1.bf16.msra.mxu0 0
    %788 = vmatprep.subr.bf16.mxu0 0
    %789 = vmatpush1.bf16.msra.mxu0 0
    %790 = vmatprep.subr.bf16.mxu0 0
    %791 = vmatpush1.bf16.msra.mxu0 0
    %792 = vmatprep.subr.bf16.mxu0 0
    %793 = vmatpush1.bf16.msra.mxu0 0
    %794 = vmatprep.subr.bf16.mxu0 0
    %795 = vmatpush1.bf16.msra.mxu0 0
    %796 = vmatprep.subr.bf16.mxu0 0
    %797 = vmatpush1.bf16.msra.mxu0 0
    %798 = vmatprep.subr.bf16.mxu0 0
    %799 = vmatpush1.bf16.msra.mxu0 0
    %800 = vmatprep.subr.bf16.mxu0 0
    %801 = vmatpush1.bf16.msra.mxu0 0
    %802 = vmatprep.subr.bf16.mxu0 0
    %803 = vmatpush1.bf16.msra.mxu0 0
    %804 = vmatprep.subr.bf16.mxu0 0
    %805 = vmatpush1.bf16.msra.mxu0 0
    %806 = vmatprep.subr.bf16.mxu0 0
    %807 = vmatpush1.bf16.msra.mxu0 0
    %808 = vmatprep.subr.bf16.mxu0 0
    %809 = vmatpush1.bf16.msra.mxu0 0
    %810 = vmatprep.mubr.bf16.mxu0 0
    %811 = vmatmul.mubr.bf16.gmra.mrb[0].mxu0 %v184
    %v812 = vpop.f32.mrb[0].mxu0
    %v813 = vadd.f32 %v125, %v812
    %v814 = vpop.f32.mrb[0].mxu0
    %v815 = vpop.f32.mrb[0].mxu0
    %v816 = vadd.f32 %v126, %v815
    %v817 = vpop.f32.mrb[0].mxu0
    %818 = vdwg.mxu0
    %v819 = vpack.c.bf16 %v816, %v813
    %v821 = vunpack.c.l.b16 %v819
    %v822 = vunpack.c.h.b16 %v819
    %v823 = vpack.c.b16 %v821, %v821
    %v824 = vpack.c.b16 %v822, %v822
    %v827 = vadd.bf16 %v773, %v823
    %v828 = vadd.bf16 %v774, %v824
    %v829 = vmul.bf16 %v827, 1045249613
    %v830 = vmul.bf16 %v828, 1045249613
    %v831 = vmax.bf16 %v827, %v829
    %v832 = vmax.bf16 %v828, %v830
    %v835 = vunpack.c.l.b16 %v831
    %v836 = vunpack.c.l.b16 %v832
    %v837 = vpack.c.b16 %v836, %v835
    %839 = vmatprep.subr.bf16.mxu0 0
    %840 = vmatpush1.bf16.msra.mxu0 %v837
    %841 = vmatprep.subr.bf16.mxu0 0
    %842 = vmatpush1.bf16.msra.mxu0 0
    %843 = vmatprep.subr.bf16.mxu0 0
    %844 = vmatpush1.bf16.msra.mxu0 0
    %845 = vmatprep.subr.bf16.mxu0 0
    %846 = vmatpush1.bf16.msra.mxu0 0
    %847 = vmatprep.subr.bf16.mxu0 0
    %848 = vmatpush1.bf16.msra.mxu0 0
    %849 = vmatprep.subr.bf16.mxu0 0
    %850 = vmatpush1.bf16.msra.mxu0 0
    %851 = vmatprep.subr.bf16.mxu0 0
    %852 = vmatpush1.bf16.msra.mxu0 0
    %853 = vmatprep.subr.bf16.mxu0 0
    %854 = vmatpush1.bf16.msra.mxu0 0
    %855 = vmatprep.subr.bf16.mxu0 0
    %856 = vmatpush1.bf16.msra.mxu0 0
    %857 = vmatprep.subr.bf16.mxu0 0
    %858 = vmatpush1.bf16.msra.mxu0 0
    %859 = vmatprep.subr.bf16.mxu0 0
    %860 = vmatpush1.bf16.msra.mxu0 0
    %861 = vmatprep.subr.bf16.mxu0 0
    %862 = vmatpush1.bf16.msra.mxu0 0
    %863 = vmatprep.subr.bf16.mxu0 0
    %864 = vmatpush1.bf16.msra.mxu0 0
    %865 = vmatprep.subr.bf16.mxu0 0
    %866 = vmatpush1.bf16.msra.mxu0 0
    %867 = vmatprep.subr.bf16.mxu0 0
    %868 = vmatpush1.bf16.msra.mxu0 0
    %869 = vmatprep.subr.bf16.mxu0 0
    %870 = vmatpush1.bf16.msra.mxu0 0
    %871 = vmatprep.mubr.bf16.mxu0 0
    %872 = vmatmul.mubr.bf16.gmra.mrb[0].mxu0 %v262
    %v873 = vpop.f32.mrb[0].mxu0
    %v874 = vadd.f32 %v134, %v873
    %v875 = vpop.f32.mrb[0].mxu0
    %v876 = vpop.f32.mrb[0].mxu0
    %v877 = vadd.f32 %v139, %v876
    %v878 = vpop.f32.mrb[0].mxu0
    %879 = vmatprep.mubr.bf16.mxu0 0
    %880 = vmatmul.mubr.bf16.gmra.mrb[0].mxu0 %v265
    %v881 = vpop.f32.mrb[0].mxu0
    %v882 = vadd.f32 %v144, %v881
    %v883 = vpop.f32.mrb[0].mxu0
    %v884 = vpop.f32.mrb[0].mxu0
    %v885 = vadd.f32 %v149, %v884
    %v886 = vpop.f32.mrb[0].mxu0
    %887 = vdwg.mxu0
    %v888 = vpack.c.bf16 %v877, %v874
    %v889 = vpack.c.bf16 %v885, %v882
    %v890 = vmul.bf16 %v888, 1045249613
    %v891 = vmul.bf16 %v889, 1045249613
    %v892 = vmax.bf16 %v888, %v890
    %v893 = vmax.bf16 %v889, %v891
    %894 = vmatprep.subr.bf16.mxu0 0
    %895 = vmatpush1.bf16.msra.mxu0 %v892
    %896 = vmatprep.subr.bf16.mxu0 0
    %897 = vmatpush1.bf16.msra.mxu0 %v893
    %898 = vmatprep.subr.bf16.mxu0 0
    %899 = vmatpush1.bf16.msra.mxu0 0
    %900 = vmatprep.subr.bf16.mxu0 0
    %901 = vmatpush1.bf16.msra.mxu0 0
    %902 = vmatprep.subr.bf16.mxu0 0
    %903 = vmatpush1.bf16.msra.mxu0 0
    %904 = vmatprep.subr.bf16.mxu0 0
    %905 = vmatpush1.bf16.msra.mxu0 0
    %906 = vmatprep.subr.bf16.mxu0 0
    %907 = vmatpush1.bf16.msra.mxu0 0
    %908 = vmatprep.subr.bf16.mxu0 0
    %909 = vmatpush1.bf16.msra.mxu0 0
    %910 = vmatprep.subr.bf16.mxu0 0
    %911 = vmatpush1.bf16.msra.mxu0 0
    %912 = vmatprep.subr.bf16.mxu0 0
    %913 = vmatpush1.bf16.msra.mxu0 0
    %914 = vmatprep.subr.bf16.mxu0 0
    %915 = vmatpush1.bf16.msra.mxu0 0
    %916 = vmatprep.subr.bf16.mxu0 0
    %917 = vmatpush1.bf16.msra.mxu0 0
    %918 = vmatprep.subr.bf16.mxu0 0
    %919 = vmatpush1.bf16.msra.mxu0 0
    %920 = vmatprep.subr.bf16.mxu0 0
    %921 = vmatpush1.bf16.msra.mxu0 0
    %922 = vmatprep.subr.bf16.mxu0 0
    %923 = vmatpush1.bf16.msra.mxu0 0
    %924 = vmatprep.subr.bf16.mxu0 0
    %925 = vmatpush1.bf16.msra.mxu0 0
    %926 = vmatprep.mubr.bf16.mxu0 0
    %927 = vmatmul.mubr.bf16.gmra.mrb[0].mxu0 %v334
    %v928 = vpop.f32.mrb[0].mxu0
    %v929 = vadd.f32 %v158, %v928
    %v930 = vpop.f32.mrb[0].mxu0
    %v931 = vpop.f32.mrb[0].mxu0
    %v932 = vadd.f32 %v163, %v931
    %v933 = vpop.f32.mrb[0].mxu0
    %934 = vmatprep.mubr.bf16.mxu0 0
    %935 = vmatmul.mubr.bf16.gmra.mrb[0].mxu0 %v337
    %v936 = vpop.f32.mrb[0].mxu0
    %v937 = vadd.f32 %v168, %v936
    %v938 = vpop.f32.mrb[0].mxu0
    %v939 = vpop.f32.mrb[0].mxu0
    %v940 = vadd.f32 %v173, %v939
    %v941 = vpop.f32.mrb[0].mxu0
    %942 = vdwg.mxu0
    %v943 = vmul.f32 %v929, 0.2
    %v944 = vmul.f32 %v932, 0.2
    %v945 = vmul.f32 %v937, 0.2
    %v946 = vmul.f32 %v940, 0.2
    %v947 = vmax.f32 %v929, %v943
    %v948 = vmax.f32 %v932, %v944
    %v949 = vmax.f32 %v937, %v945
    %v950 = vmax.f32 %v940, %v946
    %v951 = vadd.f32 %v766, %v947
    %v952 = vadd.f32 %v767, %v948
    %v953 = vadd.f32 %v768, %v949
    %v954 = vadd.f32 %v769, %v950
    %s955 = scalar_lea.vmem %s1, 8
    %v956 = vld [vmem:[%s955] sm:$0x3]
    %s957 = scalar_lea.vmem %s2, 32
    %v958 = vld [vmem:[%s957] sm:$0xf]
    %v959 = vld [vmem:[%s957 + $0x4] sm:$0xf]
    %v961 = vand.u32 %v956, %v78
    %963 = vmatprep.subr.bf16.mxu0 0
    %964 = vmatpush1.bf16.msra.mxu0 %v961
    %965 = vmatprep.subr.bf16.mxu0 0
    %966 = vmatpush1.bf16.msra.mxu0 0
    %967 = vmatprep.subr.bf16.mxu0 0
    %968 = vmatpush1.bf16.msra.mxu0 0
    %969 = vmatprep.subr.bf16.mxu0 0
    %970 = vmatpush1.bf16.msra.mxu0 0
    %971 = vmatprep.subr.bf16.mxu0 0
    %972 = vmatpush1.bf16.msra.mxu0 0
    %973 = vmatprep.subr.bf16.mxu0 0
    %974 = vmatpush1.bf16.msra.mxu0 0
    %975 = vmatprep.subr.bf16.mxu0 0
    %976 = vmatpush1.bf16.msra.mxu0 0
    %977 = vmatprep.subr.bf16.mxu0 0
    %978 = vmatpush1.bf16.msra.mxu0 0
    %979 = vmatprep.subr.bf16.mxu0 0
    %980 = vmatpush1.bf16.msra.mxu0 0
    %981 = vmatprep.subr.bf16.mxu0 0
    %982 = vmatpush1.bf16.msra.mxu0 0
    %983 = vmatprep.subr.bf16.mxu0 0
    %984 = vmatpush1.bf16.msra.mxu0 0
    %985 = vmatprep.subr.bf16.mxu0 0
    %986 = vmatpush1.bf16.msra.mxu0 0
    %987 = vmatprep.subr.bf16.mxu0 0
    %988 = vmatpush1.bf16.msra.mxu0 0
    %989 = vmatprep.subr.bf16.mxu0 0
    %990 = vmatpush1.bf16.msra.mxu0 0
    %991 = vmatprep.subr.bf16.mxu0 0
    %992 = vmatpush1.bf16.msra.mxu0 0
    %993 = vmatprep.subr.bf16.mxu0 0
    %994 = vmatpush1.bf16.msra.mxu0 0
    %995 = vmatprep.mubr.bf16.mxu0 0
    %996 = vmatmul.mubr.bf16.gmra.mrb[0].mxu0 %v184
    %v997 = vpop.f32.mrb[0].mxu0
    %v998 = vadd.f32 %v125, %v997
    %v999 = vpop.f32.mrb[0].mxu0
    %v1000 = vpop.f32.mrb[0].mxu0
    %v1001 = vadd.f32 %v126, %v1000
    %v1002 = vpop.f32.mrb[0].mxu0
    %1003 = vdwg.mxu0
    %v1004 = vpack.c.bf16 %v1001, %v998
    %v1006 = vunpack.c.l.b16 %v1004
    %v1007 = vunpack.c.h.b16 %v1004
    %v1008 = vpack.c.b16 %v1006, %v1006
    %v1009 = vpack.c.b16 %v1007, %v1007
    %v1012 = vadd.bf16 %v958, %v1008
    %v1013 = vadd.bf16 %v959, %v1009
    %v1014 = vmul.bf16 %v1012, 1045249613
    %v1015 = vmul.bf16 %v1013, 1045249613
    %v1016 = vmax.bf16 %v1012, %v1014
    %v1017 = vmax.bf16 %v1013, %v1015
    %v1020 = vunpack.c.l.b16 %v1016
    %v1021 = vunpack.c.l.b16 %v1017
    %v1022 = vpack.c.b16 %v1021, %v1020
    %1024 = vmatprep.subr.bf16.mxu0 0
    %1025 = vmatpush1.bf16.msra.mxu0 %v1022
    %1026 = vmatprep.subr.bf16.mxu0 0
    %1027 = vmatpush1.bf16.msra.mxu0 0
    %1028 = vmatprep.subr.bf16.mxu0 0
    %1029 = vmatpush1.bf16.msra.mxu0 0
    %1030 = vmatprep.subr.bf16.mxu0 0
    %1031 = vmatpush1.bf16.msra.mxu0 0
    %1032 = vmatprep.subr.bf16.mxu0 0
    %1033 = vmatpush1.bf16.msra.mxu0 0
    %1034 = vmatprep.subr.bf16.mxu0 0
    %1035 = vmatpush1.bf16.msra.mxu0 0
    %1036 = vmatprep.subr.bf16.mxu0 0
    %1037 = vmatpush1.bf16.msra.mxu0 0
    %1038 = vmatprep.subr.bf16.mxu0 0
    %1039 = vmatpush1.bf16.msra.mxu0 0
    %1040 = vmatprep.subr.bf16.mxu0 0
    %1041 = vmatpush1.bf16.msra.mxu0 0
    %1042 = vmatprep.subr.bf16.mxu0 0
    %1043 = vmatpush1.bf16.msra.mxu0 0
    %1044 = vmatprep.subr.bf16.mxu0 0
    %1045 = vmatpush1.bf16.msra.mxu0 0
    %1046 = vmatprep.subr.bf16.mxu0 0
    %1047 = vmatpush1.bf16.msra.mxu0 0
    %1048 = vmatprep.subr.bf16.mxu0 0
    %1049 = vmatpush1.bf16.msra.mxu0 0
    %1050 = vmatprep.subr.bf16.mxu0 0
    %1051 = vmatpush1.bf16.msra.mxu0 0
    %1052 = vmatprep.subr.bf16.mxu0 0
    %1053 = vmatpush1.bf16.msra.mxu0 0
    %1054 = vmatprep.subr.bf16.mxu0 0
    %1055 = vmatpush1.bf16.msra.mxu0 0
    %1056 = vmatprep.mubr.bf16.mxu0 0
    %1057 = vmatmul.mubr.bf16.gmra.mrb[0].mxu0 %v262
    %v1058 = vpop.f32.mrb[0].mxu0
    %v1059 = vadd.f32 %v134, %v1058
    %v1060 = vpop.f32.mrb[0].mxu0
    %v1061 = vpop.f32.mrb[0].mxu0
    %v1062 = vadd.f32 %v139, %v1061
    %v1063 = vpop.f32.mrb[0].mxu0
    %1064 = vmatprep.mubr.bf16.mxu0 0
    %1065 = vmatmul.mubr.bf16.gmra.mrb[0].mxu0 %v265
    %v1066 = vpop.f32.mrb[0].mxu0
    %v1067 = vadd.f32 %v144, %v1066
    %v1068 = vpop.f32.mrb[0].mxu0
    %v1069 = vpop.f32.mrb[0].mxu0
    %v1070 = vadd.f32 %v149, %v1069
    %v1071 = vpop.f32.mrb[0].mxu0
    %1072 = vdwg.mxu0
    %v1073 = vpack.c.bf16 %v1062, %v1059
    %v1074 = vpack.c.bf16 %v1070, %v1067
    %v1075 = vmul.bf16 %v1073, 1045249613
    %v1076 = vmul.bf16 %v1074, 1045249613
    %v1077 = vmax.bf16 %v1073, %v1075
    %v1078 = vmax.bf16 %v1074, %v1076
    %1079 = vmatprep.subr.bf16.mxu0 0
    %1080 = vmatpush1.bf16.msra.mxu0 %v1077
    %1081 = vmatprep.subr.bf16.mxu0 0
    %1082 = vmatpush1.bf16.msra.mxu0 %v1078
    %1083 = vmatprep.subr.bf16.mxu0 0
    %1084 = vmatpush1.bf16.msra.mxu0 0
    %1085 = vmatprep.subr.bf16.mxu0 0
    %1086 = vmatpush1.bf16.msra.mxu0 0
    %1087 = vmatprep.subr.bf16.mxu0 0
    %1088 = vmatpush1.bf16.msra.mxu0 0
    %1089 = vmatprep.subr.bf16.mxu0 0
    %1090 = vmatpush1.bf16.msra.mxu0 0
    %1091 = vmatprep.subr.bf16.mxu0 0
    %1092 = vmatpush1.bf16.msra.mxu0 0
    %1093 = vmatprep.subr.bf16.mxu0 0
    %1094 = vmatpush1.bf16.msra.mxu0 0
    %1095 = vmatprep.subr.bf16.mxu0 0
    %1096 = vmatpush1.bf16.msra.mxu0 0
    %1097 = vmatprep.subr.bf16.mxu0 0
    %1098 = vmatpush1.bf16.msra.mxu0 0
    %1099 = vmatprep.subr.bf16.mxu0 0
    %1100 = vmatpush1.bf16.msra.mxu0 0
    %1101 = vmatprep.subr.bf16.mxu0 0
    %1102 = vmatpush1.bf16.msra.mxu0 0
    %1103 = vmatprep.subr.bf16.mxu0 0
    %1104 = vmatpush1.bf16.msra.mxu0 0
    %1105 = vmatprep.subr.bf16.mxu0 0
    %1106 = vmatpush1.bf16.msra.mxu0 0
    %1107 = vmatprep.subr.bf16.mxu0 0
    %1108 = vmatpush1.bf16.msra.mxu0 0
    %1109 = vmatprep.subr.bf16.mxu0 0
    %1110 = vmatpush1.bf16.msra.mxu0 0
    %1111 = vmatprep.mubr.bf16.mxu0 0
    %1112 = vmatmul.mubr.bf16.gmra.mrb[0].mxu0 %v334
    %v1113 = vpop.f32.mrb[0].mxu0
    %v1114 = vadd.f32 %v158, %v1113
    %v1115 = vpop.f32.mrb[0].mxu0
    %v1116 = vpop.f32.mrb[0].mxu0
    %v1117 = vadd.f32 %v163, %v1116
    %v1118 = vpop.f32.mrb[0].mxu0
    %1119 = vmatprep.mubr.bf16.mxu0 0
    %1120 = vmatmul.mubr.bf16.gmra.mrb[0].mxu0 %v337
    %v1121 = vpop.f32.mrb[0].mxu0
    %v1122 = vadd.f32 %v168, %v1121
    %v1123 = vpop.f32.mrb[0].mxu0
    %v1124 = vpop.f32.mrb[0].mxu0
    %v1125 = vadd.f32 %v173, %v1124
    %v1126 = vpop.f32.mrb[0].mxu0
    %1127 = vdwg.mxu0
    %v1128 = vmul.f32 %v1114, 0.2
    %v1129 = vmul.f32 %v1117, 0.2
    %v1130 = vmul.f32 %v1122, 0.2
    %v1131 = vmul.f32 %v1125, 0.2
    %v1132 = vmax.f32 %v1114, %v1128
    %v1133 = vmax.f32 %v1117, %v1129
    %v1134 = vmax.f32 %v1122, %v1130
    %v1135 = vmax.f32 %v1125, %v1131
    %v1136 = vadd.f32 %v951, %v1132
    %v1137 = vadd.f32 %v952, %v1133
    %v1138 = vadd.f32 %v953, %v1134
    %v1139 = vadd.f32 %v954, %v1135
    %s1140 = scalar_lea.vmem %s1, 10
    %v1141 = vld [vmem:[%s1140] sm:$0x3]
    %s1142 = scalar_lea.vmem %s2, 40
    %v1143 = vld [vmem:[%s1142] sm:$0xf]
    %v1144 = vld [vmem:[%s1142 + $0x4] sm:$0xf]
    %v1146 = vand.u32 %v1141, %v78
    %1148 = vmatprep.subr.bf16.mxu0 0
    %1149 = vmatpush1.bf16.msra.mxu0 %v1146
    %1150 = vmatprep.subr.bf16.mxu0 0
    %1151 = vmatpush1.bf16.msra.mxu0 0
    %1152 = vmatprep.subr.bf16.mxu0 0
    %1153 = vmatpush1.bf16.msra.mxu0 0
    %1154 = vmatprep.subr.bf16.mxu0 0
    %1155 = vmatpush1.bf16.msra.mxu0 0
    %1156 = vmatprep.subr.bf16.mxu0 0
    %1157 = vmatpush1.bf16.msra.mxu0 0
    %1158 = vmatprep.subr.bf16.mxu0 0
    %1159 = vmatpush1.bf16.msra.mxu0 0
    %1160 = vmatprep.subr.bf16.mxu0 0
    %1161 = vmatpush1.bf16.msra.mxu0 0
    %1162 = vmatprep.subr.bf16.mxu0 0
    %1163 = vmatpush1.bf16.msra.mxu0 0
    %1164 = vmatprep.subr.bf16.mxu0 0
    %1165 = vmatpush1.bf16.msra.mxu0 0
    %1166 = vmatprep.subr.bf16.mxu0 0
    %1167 = vmatpush1.bf16.msra.mxu0 0
    %1168 = vmatprep.subr.bf16.mxu0 0
    %1169 = vmatpush1.bf16.msra.mxu0 0
    %1170 = vmatprep.subr.bf16.mxu0 0
    %1171 = vmatpush1.bf16.msra.mxu0 0
    %1172 = vmatprep.subr.bf16.mxu0 0
    %1173 = vmatpush1.bf16.msra.mxu0 0
    %1174 = vmatprep.subr.bf16.mxu0 0
    %1175 = vmatpush1.bf16.msra.mxu0 0
    %1176 = vmatprep.subr.bf16.mxu0 0
    %1177 = vmatpush1.bf16.msra.mxu0 0
    %1178 = vmatprep.subr.bf16.mxu0 0
    %1179 = vmatpush1.bf16.msra.mxu0 0
    %1180 = vmatprep.mubr.bf16.mxu0 0
    %1181 = vmatmul.mubr.bf16.gmra.mrb[0].mxu0 %v184
    %v1182 = vpop.f32.mrb[0].mxu0
    %v1183 = vadd.f32 %v125, %v1182
    %v1184 = vpop.f32.mrb[0].mxu0
    %v1185 = vpop.f32.mrb[0].mxu0
    %v1186 = vadd.f32 %v126, %v1185
    %v1187 = vpop.f32.mrb[0].mxu0
    %1188 = vdwg.mxu0
    %v1189 = vpack.c.bf16 %v1186, %v1183
    %v1191 = vunpack.c.l.b16 %v1189
    %v1192 = vunpack.c.h.b16 %v1189
    %v1193 = vpack.c.b16 %v1191, %v1191
    %v1194 = vpack.c.b16 %v1192, %v1192
    %v1197 = vadd.bf16 %v1143, %v1193
    %v1198 = vadd.bf16 %v1144, %v1194
    %v1199 = vmul.bf16 %v1197, 1045249613
    %v1200 = vmul.bf16 %v1198, 1045249613
    %v1201 = vmax.bf16 %v1197, %v1199
    %v1202 = vmax.bf16 %v1198, %v1200
    %v1205 = vunpack.c.l.b16 %v1201
    %v1206 = vunpack.c.l.b16 %v1202
    %v1207 = vpack.c.b16 %v1206, %v1205
    %1209 = vmatprep.subr.bf16.mxu0 0
    %1210 = vmatpush1.bf16.msra.mxu0 %v1207
    %1211 = vmatprep.subr.bf16.mxu0 0
    %1212 = vmatpush1.bf16.msra.mxu0 0
    %1213 = vmatprep.subr.bf16.mxu0 0
    %1214 = vmatpush1.bf16.msra.mxu0 0
    %1215 = vmatprep.subr.bf16.mxu0 0
    %1216 = vmatpush1.bf16.msra.mxu0 0
    %1217 = vmatprep.subr.bf16.mxu0 0
    %1218 = vmatpush1.bf16.msra.mxu0 0
    %1219 = vmatprep.subr.bf16.mxu0 0
    %1220 = vmatpush1.bf16.msra.mxu0 0
    %1221 = vmatprep.subr.bf16.mxu0 0
    %1222 = vmatpush1.bf16.msra.mxu0 0
    %1223 = vmatprep.subr.bf16.mxu0 0
    %1224 = vmatpush1.bf16.msra.mxu0 0
    %1225 = vmatprep.subr.bf16.mxu0 0
    %1226 = vmatpush1.bf16.msra.mxu0 0
    %1227 = vmatprep.subr.bf16.mxu0 0
    %1228 = vmatpush1.bf16.msra.mxu0 0
    %1229 = vmatprep.subr.bf16.mxu0 0
    %1230 = vmatpush1.bf16.msra.mxu0 0
    %1231 = vmatprep.subr.bf16.mxu0 0
    %1232 = vmatpush1.bf16.msra.mxu0 0
    %1233 = vmatprep.subr.bf16.mxu0 0
    %1234 = vmatpush1.bf16.msra.mxu0 0
    %1235 = vmatprep.subr.bf16.mxu0 0
    %1236 = vmatpush1.bf16.msra.mxu0 0
    %1237 = vmatprep.subr.bf16.mxu0 0
    %1238 = vmatpush1.bf16.msra.mxu0 0
    %1239 = vmatprep.subr.bf16.mxu0 0
    %1240 = vmatpush1.bf16.msra.mxu0 0
    %1241 = vmatprep.mubr.bf16.mxu0 0
    %1242 = vmatmul.mubr.bf16.gmra.mrb[0].mxu0 %v262
    %v1243 = vpop.f32.mrb[0].mxu0
    %v1244 = vadd.f32 %v134, %v1243
    %v1245 = vpop.f32.mrb[0].mxu0
    %v1246 = vpop.f32.mrb[0].mxu0
    %v1247 = vadd.f32 %v139, %v1246
    %v1248 = vpop.f32.mrb[0].mxu0
    %1249 = vmatprep.mubr.bf16.mxu0 0
    %1250 = vmatmul.mubr.bf16.gmra.mrb[0].mxu0 %v265
    %v1251 = vpop.f32.mrb[0].mxu0
    %v1252 = vadd.f32 %v144, %v1251
    %v1253 = vpop.f32.mrb[0].mxu0
    %v1254 = vpop.f32.mrb[0].mxu0
    %v1255 = vadd.f32 %v149, %v1254
    %v1256 = vpop.f32.mrb[0].mxu0
    %1257 = vdwg.mxu0
    %v1258 = vpack.c.bf16 %v1247, %v1244
    %v1259 = vpack.c.bf16 %v1255, %v1252
    %v1260 = vmul.bf16 %v1258, 1045249613
    %v1261 = vmul.bf16 %v1259, 1045249613
    %v1262 = vmax.bf16 %v1258, %v1260
    %v1263 = vmax.bf16 %v1259, %v1261
    %1264 = vmatprep.subr.bf16.mxu0 0
    %1265 = vmatpush1.bf16.msra.mxu0 %v1262
    %1266 = vmatprep.subr.bf16.mxu0 0
    %1267 = vmatpush1.bf16.msra.mxu0 %v1263
    %1268 = vmatprep.subr.bf16.mxu0 0
    %1269 = vmatpush1.bf16.msra.mxu0 0
    %1270 = vmatprep.subr.bf16.mxu0 0
    %1271 = vmatpush1.bf16.msra.mxu0 0
    %1272 = vmatprep.subr.bf16.mxu0 0
    %1273 = vmatpush1.bf16.msra.mxu0 0
    %1274 = vmatprep.subr.bf16.mxu0 0
    %1275 = vmatpush1.bf16.msra.mxu0 0
    %1276 = vmatprep.subr.bf16.mxu0 0
    %1277 = vmatpush1.bf16.msra.mxu0 0
    %1278 = vmatprep.subr.bf16.mxu0 0
    %1279 = vmatpush1.bf16.msra.mxu0 0
    %1280 = vmatprep.subr.bf16.mxu0 0
    %1281 = vmatpush1.bf16.msra.mxu0 0
    %1282 = vmatprep.subr.bf16.mxu0 0
    %1283 = vmatpush1.bf16.msra.mxu0 0
    %1284 = vmatprep.subr.bf16.mxu0 0
    %1285 = vmatpush1.bf16.msra.mxu0 0
    %1286 = vmatprep.subr.bf16.mxu0 0
    %1287 = vmatpush1.bf16.msra.mxu0 0
    %1288 = vmatprep.subr.bf16.mxu0 0
    %1289 = vmatpush1.bf16.msra.mxu0 0
    %1290 = vmatprep.subr.bf16.mxu0 0
    %1291 = vmatpush1.bf16.msra.mxu0 0
    %1292 = vmatprep.subr.bf16.mxu0 0
    %1293 = vmatpush1.bf16.msra.mxu0 0
    %1294 = vmatprep.subr.bf16.mxu0 0
    %1295 = vmatpush1.bf16.msra.mxu0 0
    %1296 = vmatprep.mubr.bf16.mxu0 0
    %1297 = vmatmul.mubr.bf16.gmra.mrb[0].mxu0 %v334
    %v1298 = vpop.f32.mrb[0].mxu0
    %v1299 = vadd.f32 %v158, %v1298
    %v1300 = vpop.f32.mrb[0].mxu0
    %v1301 = vpop.f32.mrb[0].mxu0
    %v1302 = vadd.f32 %v163, %v1301
    %v1303 = vpop.f32.mrb[0].mxu0
    %1304 = vmatprep.mubr.bf16.mxu0 0
    %1305 = vmatmul.mubr.bf16.gmra.mrb[0].mxu0 %v337
    %v1306 = vpop.f32.mrb[0].mxu0
    %v1307 = vadd.f32 %v168, %v1306
    %v1308 = vpop.f32.mrb[0].mxu0
    %v1309 = vpop.f32.mrb[0].mxu0
    %v1310 = vadd.f32 %v173, %v1309
    %v1311 = vpop.f32.mrb[0].mxu0
    %1312 = vdwg.mxu0
    %v1313 = vmul.f32 %v1299, 0.2
    %v1314 = vmul.f32 %v1302, 0.2
    %v1315 = vmul.f32 %v1307, 0.2
    %v1316 = vmul.f32 %v1310, 0.2
    %v1317 = vmax.f32 %v1299, %v1313
    %v1318 = vmax.f32 %v1302, %v1314
    %v1319 = vmax.f32 %v1307, %v1315
    %v1320 = vmax.f32 %v1310, %v1316
    %v1321 = vadd.f32 %v1136, %v1317
    %v1322 = vadd.f32 %v1137, %v1318
    %v1323 = vadd.f32 %v1138, %v1319
    %v1324 = vadd.f32 %v1139, %v1320
    %s1325 = scalar_lea.vmem %s1, 12
    %v1326 = vld [vmem:[%s1325] sm:$0x3]
    %s1327 = scalar_lea.vmem %s2, 48
    %v1328 = vld [vmem:[%s1327] sm:$0xf]
    %v1329 = vld [vmem:[%s1327 + $0x4] sm:$0xf]
    %v1331 = vand.u32 %v1326, %v78
    %1333 = vmatprep.subr.bf16.mxu0 0
    %1334 = vmatpush1.bf16.msra.mxu0 %v1331
    %1335 = vmatprep.subr.bf16.mxu0 0
    %1336 = vmatpush1.bf16.msra.mxu0 0
    %1337 = vmatprep.subr.bf16.mxu0 0
    %1338 = vmatpush1.bf16.msra.mxu0 0
    %1339 = vmatprep.subr.bf16.mxu0 0
    %1340 = vmatpush1.bf16.msra.mxu0 0
    %1341 = vmatprep.subr.bf16.mxu0 0
    %1342 = vmatpush1.bf16.msra.mxu0 0
    %1343 = vmatprep.subr.bf16.mxu0 0
    %1344 = vmatpush1.bf16.msra.mxu0 0
    %1345 = vmatprep.subr.bf16.mxu0 0
    %1346 = vmatpush1.bf16.msra.mxu0 0
    %1347 = vmatprep.subr.bf16.mxu0 0
    %1348 = vmatpush1.bf16.msra.mxu0 0
    %1349 = vmatprep.subr.bf16.mxu0 0
    %1350 = vmatpush1.bf16.msra.mxu0 0
    %1351 = vmatprep.subr.bf16.mxu0 0
    %1352 = vmatpush1.bf16.msra.mxu0 0
    %1353 = vmatprep.subr.bf16.mxu0 0
    %1354 = vmatpush1.bf16.msra.mxu0 0
    %1355 = vmatprep.subr.bf16.mxu0 0
    %1356 = vmatpush1.bf16.msra.mxu0 0
    %1357 = vmatprep.subr.bf16.mxu0 0
    %1358 = vmatpush1.bf16.msra.mxu0 0
    %1359 = vmatprep.subr.bf16.mxu0 0
    %1360 = vmatpush1.bf16.msra.mxu0 0
    %1361 = vmatprep.subr.bf16.mxu0 0
    %1362 = vmatpush1.bf16.msra.mxu0 0
    %1363 = vmatprep.subr.bf16.mxu0 0
    %1364 = vmatpush1.bf16.msra.mxu0 0
    %1365 = vmatprep.mubr.bf16.mxu0 0
    %1366 = vmatmul.mubr.bf16.gmra.mrb[0].mxu0 %v184
    %v1367 = vpop.f32.mrb[0].mxu0
    %v1368 = vadd.f32 %v125, %v1367
    %v1369 = vpop.f32.mrb[0].mxu0
    %v1370 = vpop.f32.mrb[0].mxu0
    %v1371 = vadd.f32 %v126, %v1370
    %v1372 = vpop.f32.mrb[0].mxu0
    %1373 = vdwg.mxu0
    %v1374 = vpack.c.bf16 %v1371, %v1368
    %v1376 = vunpack.c.l.b16 %v1374
    %v1377 = vunpack.c.h.b16 %v1374
    %v1378 = vpack.c.b16 %v1376, %v1376
    %v1379 = vpack.c.b16 %v1377, %v1377
    %v1382 = vadd.bf16 %v1328, %v1378
    %v1383 = vadd.bf16 %v1329, %v1379
    %v1384 = vmul.bf16 %v1382, 1045249613
    %v1385 = vmul.bf16 %v1383, 1045249613
    %v1386 = vmax.bf16 %v1382, %v1384
    %v1387 = vmax.bf16 %v1383, %v1385
    %v1390 = vunpack.c.l.b16 %v1386
    %v1391 = vunpack.c.l.b16 %v1387
    %v1392 = vpack.c.b16 %v1391, %v1390
    %1394 = vmatprep.subr.bf16.mxu0 0
    %1395 = vmatpush1.bf16.msra.mxu0 %v1392
    %1396 = vmatprep.subr.bf16.mxu0 0
    %1397 = vmatpush1.bf16.msra.mxu0 0
    %1398 = vmatprep.subr.bf16.mxu0 0
    %1399 = vmatpush1.bf16.msra.mxu0 0
    %1400 = vmatprep.subr.bf16.mxu0 0
    %1401 = vmatpush1.bf16.msra.mxu0 0
    %1402 = vmatprep.subr.bf16.mxu0 0
    %1403 = vmatpush1.bf16.msra.mxu0 0
    %1404 = vmatprep.subr.bf16.mxu0 0
    %1405 = vmatpush1.bf16.msra.mxu0 0
    %1406 = vmatprep.subr.bf16.mxu0 0
    %1407 = vmatpush1.bf16.msra.mxu0 0
    %1408 = vmatprep.subr.bf16.mxu0 0
    %1409 = vmatpush1.bf16.msra.mxu0 0
    %1410 = vmatprep.subr.bf16.mxu0 0
    %1411 = vmatpush1.bf16.msra.mxu0 0
    %1412 = vmatprep.subr.bf16.mxu0 0
    %1413 = vmatpush1.bf16.msra.mxu0 0
    %1414 = vmatprep.subr.bf16.mxu0 0
    %1415 = vmatpush1.bf16.msra.mxu0 0
    %1416 = vmatprep.subr.bf16.mxu0 0
    %1417 = vmatpush1.bf16.msra.mxu0 0
    %1418 = vmatprep.subr.bf16.mxu0 0
    %1419 = vmatpush1.bf16.msra.mxu0 0
    %1420 = vmatprep.subr.bf16.mxu0 0
    %1421 = vmatpush1.bf16.msra.mxu0 0
    %1422 = vmatprep.subr.bf16.mxu0 0
    %1423 = vmatpush1.bf16.msra.mxu0 0
    %1424 = vmatprep.subr.bf16.mxu0 0
    %1425 = vmatpush1.bf16.msra.mxu0 0
    %1426 = vmatprep.mubr.bf16.mxu0 0
    %1427 = vmatmul.mubr.bf16.gmra.mrb[0].mxu0 %v262
    %v1428 = vpop.f32.mrb[0].mxu0
    %v1429 = vadd.f32 %v134, %v1428
    %v1430 = vpop.f32.mrb[0].mxu0
    %v1431 = vpop.f32.mrb[0].mxu0
    %v1432 = vadd.f32 %v139, %v1431
    %v1433 = vpop.f32.mrb[0].mxu0
    %1434 = vmatprep.mubr.bf16.mxu0 0
    %1435 = vmatmul.mubr.bf16.gmra.mrb[0].mxu0 %v265
    %v1436 = vpop.f32.mrb[0].mxu0
    %v1437 = vadd.f32 %v144, %v1436
    %v1438 = vpop.f32.mrb[0].mxu0
    %v1439 = vpop.f32.mrb[0].mxu0
    %v1440 = vadd.f32 %v149, %v1439
    %v1441 = vpop.f32.mrb[0].mxu0
    %1442 = vdwg.mxu0
    %v1443 = vpack.c.bf16 %v1432, %v1429
    %v1444 = vpack.c.bf16 %v1440, %v1437
    %v1445 = vmul.bf16 %v1443, 1045249613
    %v1446 = vmul.bf16 %v1444, 1045249613
    %v1447 = vmax.bf16 %v1443, %v1445
    %v1448 = vmax.bf16 %v1444, %v1446
    %1449 = vmatprep.subr.bf16.mxu0 0
    %1450 = vmatpush1.bf16.msra.mxu0 %v1447
    %1451 = vmatprep.subr.bf16.mxu0 0
    %1452 = vmatpush1.bf16.msra.mxu0 %v1448
    %1453 = vmatprep.subr.bf16.mxu0 0
    %1454 = vmatpush1.bf16.msra.mxu0 0
    %1455 = vmatprep.subr.bf16.mxu0 0
    %1456 = vmatpush1.bf16.msra.mxu0 0
    %1457 = vmatprep.subr.bf16.mxu0 0
    %1458 = vmatpush1.bf16.msra.mxu0 0
    %1459 = vmatprep.subr.bf16.mxu0 0
    %1460 = vmatpush1.bf16.msra.mxu0 0
    %1461 = vmatprep.subr.bf16.mxu0 0
    %1462 = vmatpush1.bf16.msra.mxu0 0
    %1463 = vmatprep.subr.bf16.mxu0 0
    %1464 = vmatpush1.bf16.msra.mxu0 0
    %1465 = vmatprep.subr.bf16.mxu0 0
    %1466 = vmatpush1.bf16.msra.mxu0 0
    %1467 = vmatprep.subr.bf16.mxu0 0
    %1468 = vmatpush1.bf16.msra.mxu0 0
    %1469 = vmatprep.subr.bf16.mxu0 0
    %1470 = vmatpush1.bf16.msra.mxu0 0
    %1471 = vmatprep.subr.bf16.mxu0 0
    %1472 = vmatpush1.bf16.msra.mxu0 0
    %1473 = vmatprep.subr.bf16.mxu0 0
    %1474 = vmatpush1.bf16.msra.mxu0 0
    %1475 = vmatprep.subr.bf16.mxu0 0
    %1476 = vmatpush1.bf16.msra.mxu0 0
    %1477 = vmatprep.subr.bf16.mxu0 0
    %1478 = vmatpush1.bf16.msra.mxu0 0
    %1479 = vmatprep.subr.bf16.mxu0 0
    %1480 = vmatpush1.bf16.msra.mxu0 0
    %1481 = vmatprep.mubr.bf16.mxu0 0
    %1482 = vmatmul.mubr.bf16.gmra.mrb[0].mxu0 %v334
    %v1483 = vpop.f32.mrb[0].mxu0
    %v1484 = vadd.f32 %v158, %v1483
    %v1485 = vpop.f32.mrb[0].mxu0
    %v1486 = vpop.f32.mrb[0].mxu0
    %v1487 = vadd.f32 %v163, %v1486
    %v1488 = vpop.f32.mrb[0].mxu0
    %1489 = vmatprep.mubr.bf16.mxu0 0
    %1490 = vmatmul.mubr.bf16.gmra.mrb[0].mxu0 %v337
    %v1491 = vpop.f32.mrb[0].mxu0
    %v1492 = vadd.f32 %v168, %v1491
    %v1493 = vpop.f32.mrb[0].mxu0
    %v1494 = vpop.f32.mrb[0].mxu0
    %v1495 = vadd.f32 %v173, %v1494
    %v1496 = vpop.f32.mrb[0].mxu0
    %1497 = vdwg.mxu0
    %v1498 = vmul.f32 %v1484, 0.2
    %v1499 = vmul.f32 %v1487, 0.2
    %v1500 = vmul.f32 %v1492, 0.2
    %v1501 = vmul.f32 %v1495, 0.2
    %v1502 = vmax.f32 %v1484, %v1498
    %v1503 = vmax.f32 %v1487, %v1499
    %v1504 = vmax.f32 %v1492, %v1500
    %v1505 = vmax.f32 %v1495, %v1501
    %v1506 = vadd.f32 %v1321, %v1502
    %v1507 = vadd.f32 %v1322, %v1503
    %v1508 = vadd.f32 %v1323, %v1504
    %v1509 = vadd.f32 %v1324, %v1505
    %s1510 = scalar_lea.vmem %s1, 14
    %v1511 = vld [vmem:[%s1510] sm:$0x3]
    %s1512 = scalar_lea.vmem %s2, 56
    %v1513 = vld [vmem:[%s1512] sm:$0xf]
    %v1514 = vld [vmem:[%s1512 + $0x4] sm:$0xf]
    %v1516 = vand.u32 %v1511, %v78
    %1518 = vmatprep.subr.bf16.mxu0 0
    %1519 = vmatpush1.bf16.msra.mxu0 %v1516
    %1520 = vmatprep.subr.bf16.mxu0 0
    %1521 = vmatpush1.bf16.msra.mxu0 0
    %1522 = vmatprep.subr.bf16.mxu0 0
    %1523 = vmatpush1.bf16.msra.mxu0 0
    %1524 = vmatprep.subr.bf16.mxu0 0
    %1525 = vmatpush1.bf16.msra.mxu0 0
    %1526 = vmatprep.subr.bf16.mxu0 0
    %1527 = vmatpush1.bf16.msra.mxu0 0
    %1528 = vmatprep.subr.bf16.mxu0 0
    %1529 = vmatpush1.bf16.msra.mxu0 0
    %1530 = vmatprep.subr.bf16.mxu0 0
    %1531 = vmatpush1.bf16.msra.mxu0 0
    %1532 = vmatprep.subr.bf16.mxu0 0
    %1533 = vmatpush1.bf16.msra.mxu0 0
    %1534 = vmatprep.subr.bf16.mxu0 0
    %1535 = vmatpush1.bf16.msra.mxu0 0
    %1536 = vmatprep.subr.bf16.mxu0 0
    %1537 = vmatpush1.bf16.msra.mxu0 0
    %1538 = vmatprep.subr.bf16.mxu0 0
    %1539 = vmatpush1.bf16.msra.mxu0 0
    %1540 = vmatprep.subr.bf16.mxu0 0
    %1541 = vmatpush1.bf16.msra.mxu0 0
    %1542 = vmatprep.subr.bf16.mxu0 0
    %1543 = vmatpush1.bf16.msra.mxu0 0
    %1544 = vmatprep.subr.bf16.mxu0 0
    %1545 = vmatpush1.bf16.msra.mxu0 0
    %1546 = vmatprep.subr.bf16.mxu0 0
    %1547 = vmatpush1.bf16.msra.mxu0 0
    %1548 = vmatprep.subr.bf16.mxu0 0
    %1549 = vmatpush1.bf16.msra.mxu0 0
    %1550 = vmatprep.mubr.bf16.mxu0 0
    %1551 = vmatmul.mubr.bf16.gmra.mrb[0].mxu0 %v184
    %v1552 = vpop.f32.mrb[0].mxu0
    %v1553 = vadd.f32 %v125, %v1552
    %v1554 = vpop.f32.mrb[0].mxu0
    %v1555 = vpop.f32.mrb[0].mxu0
    %v1556 = vadd.f32 %v126, %v1555
    %v1557 = vpop.f32.mrb[0].mxu0
    %1558 = vdwg.mxu0
    %v1559 = vpack.c.bf16 %v1556, %v1553
    %v1561 = vunpack.c.l.b16 %v1559
    %v1562 = vunpack.c.h.b16 %v1559
    %v1563 = vpack.c.b16 %v1561, %v1561
    %v1564 = vpack.c.b16 %v1562, %v1562
    %v1567 = vadd.bf16 %v1513, %v1563
    %v1568 = vadd.bf16 %v1514, %v1564
    %v1569 = vmul.bf16 %v1567, 1045249613
    %v1570 = vmul.bf16 %v1568, 1045249613
    %v1571 = vmax.bf16 %v1567, %v1569
    %v1572 = vmax.bf16 %v1568, %v1570
    %v1575 = vunpack.c.l.b16 %v1571
    %v1576 = vunpack.c.l.b16 %v1572
    %v1577 = vpack.c.b16 %v1576, %v1575
    %1579 = vmatprep.subr.bf16.mxu0 0
    %1580 = vmatpush1.bf16.msra.mxu0 %v1577
    %1581 = vmatprep.subr.bf16.mxu0 0
    %1582 = vmatpush1.bf16.msra.mxu0 0
    %1583 = vmatprep.subr.bf16.mxu0 0
    %1584 = vmatpush1.bf16.msra.mxu0 0
    %1585 = vmatprep.subr.bf16.mxu0 0
    %1586 = vmatpush1.bf16.msra.mxu0 0
    %1587 = vmatprep.subr.bf16.mxu0 0
    %1588 = vmatpush1.bf16.msra.mxu0 0
    %1589 = vmatprep.subr.bf16.mxu0 0
    %1590 = vmatpush1.bf16.msra.mxu0 0
    %1591 = vmatprep.subr.bf16.mxu0 0
    %1592 = vmatpush1.bf16.msra.mxu0 0
    %1593 = vmatprep.subr.bf16.mxu0 0
    %1594 = vmatpush1.bf16.msra.mxu0 0
    %1595 = vmatprep.subr.bf16.mxu0 0
    %1596 = vmatpush1.bf16.msra.mxu0 0
    %1597 = vmatprep.subr.bf16.mxu0 0
    %1598 = vmatpush1.bf16.msra.mxu0 0
    %1599 = vmatprep.subr.bf16.mxu0 0
    %1600 = vmatpush1.bf16.msra.mxu0 0
    %1601 = vmatprep.subr.bf16.mxu0 0
    %1602 = vmatpush1.bf16.msra.mxu0 0
    %1603 = vmatprep.subr.bf16.mxu0 0
    %1604 = vmatpush1.bf16.msra.mxu0 0
    %1605 = vmatprep.subr.bf16.mxu0 0
    %1606 = vmatpush1.bf16.msra.mxu0 0
    %1607 = vmatprep.subr.bf16.mxu0 0
    %1608 = vmatpush1.bf16.msra.mxu0 0
    %1609 = vmatprep.subr.bf16.mxu0 0
    %1610 = vmatpush1.bf16.msra.mxu0 0
    %1611 = vmatprep.mubr.bf16.mxu0 0
    %1612 = vmatmul.mubr.bf16.gmra.mrb[0].mxu0 %v262
    %v1613 = vpop.f32.mrb[0].mxu0
    %v1614 = vadd.f32 %v134, %v1613
    %v1615 = vpop.f32.mrb[0].mxu0
    %v1616 = vpop.f32.mrb[0].mxu0
    %v1617 = vadd.f32 %v139, %v1616
    %v1618 = vpop.f32.mrb[0].mxu0
    %1619 = vmatprep.mubr.bf16.mxu0 0
    %1620 = vmatmul.mubr.bf16.gmra.mrb[0].mxu0 %v265
    %v1621 = vpop.f32.mrb[0].mxu0
    %v1622 = vadd.f32 %v144, %v1621
    %v1623 = vpop.f32.mrb[0].mxu0
    %v1624 = vpop.f32.mrb[0].mxu0
    %v1625 = vadd.f32 %v149, %v1624
    %v1626 = vpop.f32.mrb[0].mxu0
    %1627 = vdwg.mxu0
    %v1628 = vpack.c.bf16 %v1617, %v1614
    %v1629 = vpack.c.bf16 %v1625, %v1622
    %v1630 = vmul.bf16 %v1628, 1045249613
    %v1631 = vmul.bf16 %v1629, 1045249613
    %v1632 = vmax.bf16 %v1628, %v1630
    %v1633 = vmax.bf16 %v1629, %v1631
    %1634 = vmatprep.subr.bf16.mxu0 0
    %1635 = vmatpush1.bf16.msra.mxu0 %v1632
    %1636 = vmatprep.subr.bf16.mxu0 0
    %1637 = vmatpush1.bf16.msra.mxu0 %v1633
    %1638 = vmatprep.subr.bf16.mxu0 0
    %1639 = vmatpush1.bf16.msra.mxu0 0
    %1640 = vmatprep.subr.bf16.mxu0 0
    %1641 = vmatpush1.bf16.msra.mxu0 0
    %1642 = vmatprep.subr.bf16.mxu0 0
    %1643 = vmatpush1.bf16.msra.mxu0 0
    %1644 = vmatprep.subr.bf16.mxu0 0
    %1645 = vmatpush1.bf16.msra.mxu0 0
    %1646 = vmatprep.subr.bf16.mxu0 0
    %1647 = vmatpush1.bf16.msra.mxu0 0
    %1648 = vmatprep.subr.bf16.mxu0 0
    %1649 = vmatpush1.bf16.msra.mxu0 0
    %1650 = vmatprep.subr.bf16.mxu0 0
    %1651 = vmatpush1.bf16.msra.mxu0 0
    %1652 = vmatprep.subr.bf16.mxu0 0
    %1653 = vmatpush1.bf16.msra.mxu0 0
    %1654 = vmatprep.subr.bf16.mxu0 0
    %1655 = vmatpush1.bf16.msra.mxu0 0
    %1656 = vmatprep.subr.bf16.mxu0 0
    %1657 = vmatpush1.bf16.msra.mxu0 0
    %1658 = vmatprep.subr.bf16.mxu0 0
    %1659 = vmatpush1.bf16.msra.mxu0 0
    %1660 = vmatprep.subr.bf16.mxu0 0
    %1661 = vmatpush1.bf16.msra.mxu0 0
    %1662 = vmatprep.subr.bf16.mxu0 0
    %1663 = vmatpush1.bf16.msra.mxu0 0
    %1664 = vmatprep.subr.bf16.mxu0 0
    %1665 = vmatpush1.bf16.msra.mxu0 0
    %1666 = vmatprep.mubr.bf16.mxu0 0
    %1667 = vmatmul.mubr.bf16.gmra.mrb[0].mxu0 %v334
    %v1668 = vpop.f32.mrb[0].mxu0
    %v1669 = vadd.f32 %v158, %v1668
    %v1670 = vpop.f32.mrb[0].mxu0
    %v1671 = vpop.f32.mrb[0].mxu0
    %v1672 = vadd.f32 %v163, %v1671
    %v1673 = vpop.f32.mrb[0].mxu0
    %1674 = vmatprep.mubr.bf16.mxu0 0
    %1675 = vmatmul.mubr.bf16.gmra.mrb[0].mxu0 %v337
    %v1676 = vpop.f32.mrb[0].mxu0
    %v1677 = vadd.f32 %v168, %v1676
    %v1678 = vpop.f32.mrb[0].mxu0
    %v1679 = vpop.f32.mrb[0].mxu0
    %v1680 = vadd.f32 %v173, %v1679
    %v1681 = vpop.f32.mrb[0].mxu0
    %1682 = vdwg.mxu0
    %v1683 = vmul.f32 %v1669, 0.2
    %v1684 = vmul.f32 %v1672, 0.2
    %v1685 = vmul.f32 %v1677, 0.2
    %v1686 = vmul.f32 %v1680, 0.2
    %v1687 = vmax.f32 %v1669, %v1683
    %v1688 = vmax.f32 %v1672, %v1684
    %v1689 = vmax.f32 %v1677, %v1685
    %v1690 = vmax.f32 %v1680, %v1686
    %v1691 = vadd.f32 %v1506, %v1687
    %v1692 = vadd.f32 %v1507, %v1688
    %v1693 = vadd.f32 %v1508, %v1689
    %v1694 = vadd.f32 %v1509, %v1690
    %1695 = vst [vmem:[#allocation2] sm:$0xff] %v1691
    %1696 = vst [vmem:[#allocation2 + $0x8] sm:$0xff] %v1692
    %1697 = vst [vmem:[#allocation2 + $0x10] sm:$0xff] %v1693
    %1698 = vst [vmem:[#allocation2 + $0x18] sm:$0xff] %v1694
    // Predicated region
    $region46: #{tpu_custom_call.1} parent=1 // pred_check
      _
    $region47: #{tpu_custom_call.1} parent=1 // pred_check_branch
      %1700 = sbr.rel (0) target = $region49
    $region48: #{tpu_custom_call.1} parent=1 // pred_region
      %s1702 = ssub.s32 512, 512
      %1703 = vsyncadd [#allocation3], %s1702
      %s1704 = sshll.u32 [#allocation2], 4
      %s1705 = int_to_ptr.vmem [resolvable:$true] %s1704
      %1710 = dma.vmem_to_hbm [thread:$0]  %s1705, 512, %s11, [#allocation3], 128, 128, 8
    $region49: #{tpu_custom_call.1} parent=1 // pred_fallthru
      _
    // Predicated region
    $region50: #{tpu_custom_call.1} parent=1 // pred_check
      _
    $region51: #{tpu_custom_call.1} parent=1 // pred_check_branch
      %1712 = sbr.rel (0) target = $region53
    $region52: #{tpu_custom_call.1} parent=1 // pred_region
      %1713 = dma.done [#allocation3], 512
    $region53: #{tpu_custom_call.1} parent=1 // pred_fallthru
      _
    %1714 = vsyncpa [#allocation3], 1

</llo_original>
